<compile_context>
chip_gen: v7x
topology: tpu7x:2x2x1
jax: 0.10.0
libtpu: 0.0.40
codegen_flags: <defaults>
</compile_context>

<pallas_src>
import math
import functools

import jax
import jax.numpy as jnp
from jax import lax
from jax.experimental import pallas as pl
from jax.experimental.pallas import tpu as pltpu


# -----------------------------------------------------------------------------
# Pallas kernel: fused IPA cross-attention core for one (batch, query-tile) step
# -----------------------------------------------------------------------------
def _ipca_attention_kernel(qf_ref, kf_ref, v_ref, gv_ref,
                           pair_bias_ref, qbias_ref, kb_ref, pv_ref,
                           out_ref, p_scratch,
                           *, num_heads, c_pair, head_dim, pv3):
    """Block shapes (leading size-1 batch dim):
      qf_ref        (1, H, TQ, Dk)   Dk = Dh + 3*Pq, [q/sqrt(Dh) | 2c*gq]
      kf_ref        (1, H, Nk, Dk)   [k | gk]
      v_ref         (1, H, Nk, Dh)
      gv_ref        (1, H, Nk, 3Pv)
      pair_bias_ref (1, H, TQ, Nk)   f32
      qbias_ref     (1, H, TQ, 1)    f32  (-c*||gq||^2)
      kb_ref        (1, H, 1, Nk)    f32  (-c*||gk||^2 + additive mask)
      pv_ref        (1, TQ, Nk, C)   pair representation, query-major
      out_ref       (1, H, TQ, F)    F = C + Dh + 3Pv, f32 (packed output)
      p_scratch     (H, TQ, Nk)      f32 attention probabilities
    """
    C, Dh, P3 = c_pair, head_dim, pv3
    cdtype = v_ref.dtype

    for h in range(num_heads):                       # static unroll over IPA heads
        # Single fused logits matmul on the MXU (q.k + point cross term), f32 acc.
        logits = lax.dot_general(
            qf_ref[0, h], kf_ref[0, h],
            (((1,), (1,)), ((), ())),                # contract Dk vs Dk (no kT needed)
            preferred_element_type=jnp.float32)      # [TQ, Nk]
        logits = logits + pair_bias_ref[0, h] + qbias_ref[0, h] + kb_ref[0, h]

        # numerically-stable softmax; normalization via reciprocal-multiply
        m = jnp.max(logits, axis=-1, keepdims=True)
        e = jnp.exp(logits - m)
        inv = pl.reciprocal(jnp.sum(e, axis=-1, keepdims=True), approx=False)
        attn = e * inv                               # f32 [TQ, Nk]
        p_scratch[h] = attn                          # stash for the pair matmul

        attn_c = attn.astype(cdtype)
        ctx = lax.dot_general(attn_c, v_ref[0, h], (((1,), (0,)), ((), ())),
                              preferred_element_type=jnp.float32)     # [TQ, Dh]
        pts = lax.dot_general(attn_c, gv_ref[0, h], (((1,), (0,)), ((), ())),
                              preferred_element_type=jnp.float32)     # [TQ, 3Pv]
        out_ref[0, h, :, C:C + Dh] = ctx
        out_ref[0, h, :, C + Dh:C + Dh + P3] = pts

    # pair output for all heads at once: per-query [H,Nk] @ [Nk,C] on the MXU
    # (query-batched dot) instead of a [C, TQ, Nk] broadcast-multiply-reduce.
    p_all = jnp.transpose(p_scratch[...], (1, 0, 2)).astype(cdtype)   # [TQ, H, Nk]
    pair = lax.dot_general(
        p_all, pv_ref[0],
        (((2,), (1,)), ((0,), (0,))),                # contract Nk, batch over queries
        preferred_element_type=jnp.float32)          # [TQ, H, C]
    out_ref[0, :, :, 0:C] = jnp.transpose(pair, (1, 0, 2))            # [H, TQ, C]


def _pick_tile_and_vmem(nq, nk, h, dk, dh, p3, c, itemsize,
                        budget_bytes=40 * 1024 * 1024):
    """Largest query tile whose (double-buffered) working set fits the VMEM budget.
    Budget is sized for v7x's 64 MiB/TC; v5e/v6e (128 MiB) fit a fortiori."""
    f32 = 4
    fixed = h * nk * (dk + dh + p3) * itemsize + h * nk * f32          # kf, v, gv, kb
    per_q = (h * dk * itemsize            # qf
             + h * nk * f32               # pair_bias
             + h * f32                    # qbias
             + nk * c * itemsize          # pair_val
             + h * (c + dh + p3) * f32)   # packed output
    cands = [t for t in (256, 128, 64, 32, 16, 8) if nq % t == 0] or [nq]
    tile = cands[-1]
    for t in cands:                                   # descending: first fit = largest
        if 2 * (fixed + t * per_q) + t * h * nk * f32 <= budget_bytes:
            tile = t
            break
    est = 2 * (fixed + tile * per_q) + tile * h * nk * f32
    vmem_limit = int(min(48 * 1024 * 1024, max(est + (8 << 20), 16 << 20)))
    return tile, vmem_limit


def ipca_point_attention(qf, kf, v, gv, pair_bias, qbias, kb, pair_val):
    """Fused IPA attention core.  Returns packed features [B, H, Nq, C+Dh+3Pv] (f32)."""
    B, H, Nq, Dk = qf.shape
    Nk = kf.shape[2]
    Dh = v.shape[3]
    P3 = gv.shape[3]
    C = pair_val.shape[3]
    F = C + Dh + P3
    itemsize = jnp.dtype(qf.dtype).itemsize
    tile_q, vmem_limit = _pick_tile_and_vmem(Nq, Nk, H, Dk, Dh, P3, C, itemsize)
    # TODO(synk): for very long encoder sequences add a flash-style Nk grid axis
    # (online softmax with f32 accumulators) so VMEM no longer scales with Nk.

    kernel = functools.partial(_ipca_attention_kernel, num_heads=H,
                               c_pair=C, head_dim=Dh, pv3=P3)
    return pl.pallas_call(
        kernel,
        out_shape=jax.ShapeDtypeStruct((B, H, Nq, F), jnp.float32),
        grid=(B, Nq // tile_q),
        in_specs=[
            pl.BlockSpec((1, H, tile_q, Dk), lambda b, qi: (b, 0, qi, 0)),  # qf
            pl.BlockSpec((1, H, Nk, Dk), lambda b, qi: (b, 0, 0, 0)),       # kf
            pl.BlockSpec((1, H, Nk, Dh), lambda b, qi: (b, 0, 0, 0)),       # v
            pl.BlockSpec((1, H, Nk, P3), lambda b, qi: (b, 0, 0, 0)),       # gv
            pl.BlockSpec((1, H, tile_q, Nk), lambda b, qi: (b, 0, qi, 0)),  # pair bias
            pl.BlockSpec((1, H, tile_q, 1), lambda b, qi: (b, 0, qi, 0)),   # q bias
            pl.BlockSpec((1, H, 1, Nk), lambda b, qi: (b, 0, 0, 0)),        # k bias+mask
            pl.BlockSpec((1, tile_q, Nk, C), lambda b, qi: (b, qi, 0, 0)),  # pair value
        ],
        out_specs=pl.BlockSpec((1, H, tile_q, F), lambda b, qi: (b, 0, qi, 0)),
        scratch_shapes=[pltpu.VMEM((H, tile_q, Nk), jnp.float32)],
        compiler_params=pltpu.CompilerParams(
            dimension_semantics=("parallel", "parallel"),
            vmem_limit_bytes=vmem_limit),
    )(qf, kf, v, gv, pair_bias, qbias, kb, pair_val)


# -----------------------------------------------------------------------------
# Parameters (deterministic synthetic init; matches the nn.Module shapes)
# -----------------------------------------------------------------------------
def init_params(key, hidden, enc_hidden, H, Dh, Pq, Pv, C):
    all_head = H * Dh
    keys = jax.random.split(key, 9)

    def lin(k, shape, scale=0.02):
        return (scale * jax.random.normal(k, shape)).astype(jnp.float32)

    return dict(
        Wq=lin(keys[0], (hidden, all_head)),          # query (no bias)
        Wk=lin(keys[1], (enc_hidden, all_head)),      # key   (no bias)
        Wv=lin(keys[2], (enc_hidden, all_head)),      # value (no bias)
        Wqp=lin(keys[3], (hidden, H * Pq * 3)),       # query_point
        Wkp=lin(keys[4], (enc_hidden, H * Pq * 3)),   # key_point
        Wvp=lin(keys[5], (enc_hidden, H * Pv * 3)),   # value_point
        head_weight=jax.random.normal(keys[6], (H,)).astype(jnp.float32),
        Wpair=lin(keys[7], (C, H)),                   # pair_attention (no bias)
        Wout=lin(keys[8], (H * (C + Dh + Pv * 4), hidden)),
        bout=jnp.zeros((hidden,), jnp.float32),
    )


# -----------------------------------------------------------------------------
# Forward pass (plain-JAX glue around the Pallas attention core)
# -----------------------------------------------------------------------------
def ipca_forward(params, hidden_states, encoder_hidden_states, pair_representation,
                 rigid_rotations, rigid_translations,
                 encoder_rigid_rotations, encoder_rigid_translations,
                 encoder_attention_mask, *, H, Dh, Pq, Pv,
                 use_pallas=True, compute_dtype=jnp.float32):
    B, Nq, _ = hidden_states.shape
    Nk = encoder_hidden_states.shape[1]
    C = pair_representation.shape[1]
    cd = compute_dtype

    # projections (natural [B, N, H, D] order out of the reshape)
    q = (hidden_states @ params['Wq']).reshape(B, Nq, H, Dh)
    k = (encoder_hidden_states @ params['Wk']).reshape(B, Nk, H, Dh)
    v = (encoder_hidden_states @ params['Wv']).reshape(B, Nk, H, Dh)
    qp = (hidden_states @ params['Wqp']).reshape(B, Nq, H, Pq, 3)
    kp = (encoder_hidden_states @ params['Wkp']).reshape(B, Nk, H, Pq, 3)
    vp = (encoder_hidden_states @ params['Wvp']).reshape(B, Nk, H, Pv, 3)

    # pair bias [B,H,Nq,Nk] and query-major pair value [B,Nq,Nk,C]
    pair_bias = jnp.einsum('bcij,ch->bhij', pair_representation,
                           params['Wpair']).astype(jnp.float32)
    pair_val = pair_representation.transpose(0, 2, 3, 1)

    # transform points to the global frame
    gq = jnp.einsum('bixy,bihpy->bihpx', rigid_rotations, qp) \
        + rigid_translations[:, :, None, None, :]
    gk = jnp.einsum('bjxy,bjhpy->bjhpx', encoder_rigid_rotations, kp) \
        + encoder_rigid_translations[:, :, None, None, :]
    gv = jnp.einsum('bjxy,bjhpy->bjhpx', encoder_rigid_rotations, vp) \
        + encoder_rigid_translations[:, :, None, None, :]

    weight_kv = 1.0 / math.sqrt(Dh)
    weight_points = math.sqrt(2.0 / (9.0 * Pq))
    gamma = jax.nn.softplus(params['head_weight'])          # [H]
    c = 0.5 * gamma * weight_points                         # [H]

    gq_f = gq.reshape(B, Nq, H, Pq * 3)
    gk_f = gk.reshape(B, Nk, H, Pq * 3)
    gv_f = gv.reshape(B, Nk, H, Pv * 3)

    # -c||gq||^2 - c||gk||^2 + 2c<gq,gk> == -c sum_p ||gq - gk||^2 ; biases stay f32
    qbias = (-c[None, :, None] *
             jnp.sum(gq_f * gq_f, -1).transpose(0, 2, 1))[..., None]   # [B,H,Nq,1]
    mask_add = encoder_attention_mask.reshape(B, 1, Nk).astype(jnp.float32)
    kb = (-c[None, :, None] * jnp.sum(gk_f * gk_f, -1).transpose(0, 2, 1)
          + mask_add)[:, :, None, :]                                   # [B,H,1,Nk]

    # fused logits operands: one contraction of length Dh + 3*Pq per head
    qf = jnp.concatenate([weight_kv * q,
                          (2.0 * c)[None, None, :, None] * gq_f], axis=-1)
    kf = jnp.concatenate([k, gk_f], axis=-1)

    # head-major operands; large tensors optionally bf16, accumulation stays f32
    qf_hm = qf.transpose(0, 2, 1, 3).astype(cd)      # [B,H,Nq,Dk]
    kf_hm = kf.transpose(0, 2, 1, 3).astype(cd)      # [B,H,Nk,Dk]
    v_hm = v.transpose(0, 2, 1, 3).astype(cd)        # [B,H,Nk,Dh]
    gv_hm = gv_f.transpose(0, 2, 1, 3).astype(cd)    # [B,H,Nk,3Pv]
    pv_c = pair_val.astype(cd)                       # [B,Nq,Nk,C]

    if use_pallas:
        packed = ipca_point_attention(qf_hm, kf_hm, v_hm, gv_hm,
                                      pair_bias, qbias, kb, pv_c)       # [B,H,Nq,F]
        packed = packed.transpose(0, 2, 1, 3)                           # [B,Nq,H,F]
    else:  # pure-JAX reference of the same attention core
        logits = jnp.einsum('bhid,bhjd->bhij', qf_hm, kf_hm,
                            preferred_element_type=jnp.float32)
        logits = logits + pair_bias + qbias + kb
        attn = jax.nn.softmax(logits, axis=-1).astype(cd)
        ctx = jnp.einsum('bhij,bhjd->bihd', attn, v_hm,
                         preferred_element_type=jnp.float32)
        pts = jnp.einsum('bhij,bhjf->bihf', attn, gv_hm,
                         preferred_element_type=jnp.float32)
        pairo = jnp.einsum('bhij,bijc->bihc', attn, pv_c,
                           preferred_element_type=jnp.float32)
        packed = jnp.concatenate([pairo, ctx, pts], axis=-1)            # [B,Nq,H,F]

    # unpack, map value points back to the local rigid frame, output projection
    pair_flat = packed[..., :C].reshape(B, Nq, H * C)
    ctx_flat = packed[..., C:C + Dh].reshape(B, Nq, H * Dh)
    pts_glob = packed[..., C + Dh:].reshape(B, Nq, H, Pv, 3)
    diff = pts_glob - rigid_translations[:, :, None, None, :]
    pts_local = jnp.einsum('bixy,bihpx->bihpy', rigid_rotations, diff)   # R^T (p - t)
    pts_sq = jnp.sqrt(jnp.sum(pts_local * pts_local, -1)).reshape(B, Nq, H * Pv)
    pts_flat = pts_local.reshape(B, Nq, H * Pv * 3)

    feats = jnp.concatenate([pair_flat, ctx_flat, pts_flat, pts_sq], axis=-1)
    return feats @ params['Wout'] + params['bout']


# -----------------------------------------------------------------------------
if __name__ == "__main__":
    B, Nq, Nk = 2, 8, 8
    hidden, enc_hidden = 32, 32
    H, Dh = 4, 8                 # num_ipa_heads, attention_head_size
    Pq, Pv = 4, 2                # num_query_points, num_value_points
    C = 2 + 2                    # n_pair_channels (cross attention: both configs)

    key = jax.random.PRNGKey(0)
    k_par, k_h, k_e, k_p, k_rq, k_rk = jax.random.split(key, 6)
    params = init_params(k_par, hidden, enc_hidden, H, Dh, Pq, Pv, C)

    hidden_states = jax.random.normal(k_h, (B, Nq, hidden), jnp.float32)
    encoder_hidden_states = jax.random.normal(k_e, (B, Nk, enc_hidden), jnp.float32)
    pair_representation = jax.random.normal(k_p, (B, C, Nq, Nk), jnp.float32)

    def random_rigids(k, n):
        k1, k2 = jax.random.split(k)
        rot, _ = jnp.linalg.qr(jax.random.normal(k1, (B, n, 3, 3), jnp.float32))
        trans = jax.random.normal(k2, (B, n, 3), jnp.float32)
        return rot, trans

    rigid_rotations, rigid_translations = random_rigids(k_rq, Nq)
    encoder_rigid_rotations, encoder_rigid_translations = random_rigids(k_rk, Nk)

    # BERT-style extended additive mask [B,1,1,Nk]; large negative so the
    # unbounded point-distance penalty cannot leak past it.
    key_mask = jnp.ones((B, Nk), jnp.float32).at[1, Nk - 2:].set(0.0)
    encoder_attention_mask = ((1.0 - key_mask) * -1e9)[:, None, None, :]

    args = (params, hidden_states, encoder_hidden_states, pair_representation,
            rigid_rotations, rigid_translations,
            encoder_rigid_rotations, encoder_rigid_translations,
            encoder_attention_mask)

    # float32 operands vs pure-JAX reference
    out_f32 = jax.block_until_ready(
        ipca_forward(*args, H=H, Dh=Dh, Pq=Pq, Pv=Pv, use_pallas=True))
    ref_f32 = jax.block_until_ready(
        ipca_forward(*args, H=H, Dh=Dh, Pq=Pq, Pv=Pv, use_pallas=False))
    assert out_f32.shape == (B, Nq, hidden)
    err32 = float(jnp.max(jnp.abs(out_f32 - ref_f32)))
    assert jnp.allclose(out_f32, ref_f32, rtol=1e-3, atol=1e-3), f"f32 err {err32}"

    # bfloat16 operands (f32 accumulation) vs identically-cast reference
    out_bf = jax.block_until_ready(
        ipca_forward(*args, H=H, Dh=Dh, Pq=Pq, Pv=Pv, use_pallas=True,
                     compute_dtype=jnp.bfloat16))
    ref_bf = jax.block_until_ready(
        ipca_forward(*args, H=H, Dh=Dh, Pq=Pq, Pv=Pv, use_pallas=False,
                     compute_dtype=jnp.bfloat16))
    errbf = float(jnp.max(jnp.abs(out_bf - ref_bf)))
    assert jnp.allclose(out_bf, ref_bf, rtol=2e-2, atol=2e-2), f"bf16 err {errbf}"

    print("KERNEL_OK")
</pallas_src>

<mosaic_0001>
module attributes {stable_mosaic.version = 11 : i64} {
  func.func @_ipca_attention_kernel(%arg0: i32, %arg1: i32, %arg2: memref<1x4x8x20xf32, #tpu.memory_space<vmem>>, %arg3: memref<1x4x8x20xf32, #tpu.memory_space<vmem>>, %arg4: memref<1x4x8x8xf32, #tpu.memory_space<vmem>>, %arg5: memref<1x4x8x6xf32, #tpu.memory_space<vmem>>, %arg6: memref<1x4x8x8xf32, #tpu.memory_space<vmem>>, %arg7: memref<1x4x8x1xf32, #tpu.memory_space<vmem>>, %arg8: memref<1x4x1x8xf32, #tpu.memory_space<vmem>>, %arg9: memref<1x8x8x4xf32, #tpu.memory_space<vmem>>, %arg10: memref<1x4x8x18xf32, #tpu.memory_space<vmem>>, %arg11: memref<4x8x8xf32, #tpu.memory_space<vmem>>) attributes {dimension_semantics = [#tpu.dimension_semantics<parallel>, #tpu.dimension_semantics<parallel>], iteration_bounds = array<i64: 2, 1>, scalar_prefetch = 0 : i64, scratch_operands = 1 : i64, tpu.core_type = #tpu.core_type<tc>, window_params = [{transform_indices = @transform_0, window_bounds = array<i64: 1, 4, 8, 20>}, {transform_indices = @transform_1, window_bounds = array<i64: 1, 4, 8, 20>}, {transform_indices = @transform_2, window_bounds = array<i64: 1, 4, 8, 8>}, {transform_indices = @transform_3, window_bounds = array<i64: 1, 4, 8, 6>}, {transform_indices = @transform_4, window_bounds = array<i64: 1, 4, 8, 8>}, {transform_indices = @transform_5, window_bounds = array<i64: 1, 4, 8, 1>}, {transform_indices = @transform_6, window_bounds = array<i64: 1, 4, 1, 8>}, {transform_indices = @transform_7, window_bounds = array<i64: 1, 8, 8, 4>}, {transform_indices = @transform_8, window_bounds = array<i64: 1, 4, 8, 18>}]} {
    %c0 = arith.constant 0 : index
    %c0_0 = arith.constant 0 : index
    %c0_1 = arith.constant 0 : index
    %c0_2 = arith.constant 0 : index
    %0 = vector.load %arg2[%c0, %c0_0, %c0_1, %c0_2] : memref<1x4x8x20xf32, #tpu.memory_space<vmem>>, vector<1x1x8x20xf32>
    %1 = vector.shape_cast %0 : vector<1x1x8x20xf32> to vector<8x20xf32>
    %c0_3 = arith.constant 0 : index
    %c0_4 = arith.constant 0 : index
    %c0_5 = arith.constant 0 : index
    %c0_6 = arith.constant 0 : index
    %2 = vector.load %arg3[%c0_3, %c0_4, %c0_5, %c0_6] : memref<1x4x8x20xf32, #tpu.memory_space<vmem>>, vector<1x1x8x20xf32>
    %3 = vector.shape_cast %2 : vector<1x1x8x20xf32> to vector<8x20xf32>
    %cst = arith.constant dense<0.000000e+00> : vector<8x8xf32>
    %4 = tpu.matmul %1, %3, %cst {dimension_numbers = #tpu.dot_dimension_numbers<[1], [1], [0], [0], [0, 0, 1, 0], [], []>} : vector<8x20xf32>, vector<8x20xf32>, vector<8x8xf32> -> vector<8x8xf32>
    %c0_7 = arith.constant 0 : index
    %c0_8 = arith.constant 0 : index
    %c0_9 = arith.constant 0 : index
    %c0_10 = arith.constant 0 : index
    %5 = vector.load %arg6[%c0_7, %c0_8, %c0_9, %c0_10] : memref<1x4x8x8xf32, #tpu.memory_space<vmem>>, vector<1x1x8x8xf32>
    %6 = vector.shape_cast %5 : vector<1x1x8x8xf32> to vector<8x8xf32>
    %7 = arith.addf %4, %6 : vector<8x8xf32>
    %c0_11 = arith.constant 0 : index
    %c0_12 = arith.constant 0 : index
    %c0_13 = arith.constant 0 : index
    %c0_14 = arith.constant 0 : index
    %8 = vector.load %arg7[%c0_11, %c0_12, %c0_13, %c0_14] : memref<1x4x8x1xf32, #tpu.memory_space<vmem>>, vector<1x1x8x1xf32>
    %9 = vector.shape_cast %8 : vector<1x1x8x1xf32> to vector<8x1xf32>
    %10 = vector.broadcast %9 : vector<8x1xf32> to vector<8x8xf32>
    %11 = arith.addf %7, %10 : vector<8x8xf32>
    %c0_15 = arith.constant 0 : index
    %c0_16 = arith.constant 0 : index
    %c0_17 = arith.constant 0 : index
    %c0_18 = arith.constant 0 : index
    %12 = vector.load %arg8[%c0_15, %c0_16, %c0_17, %c0_18] : memref<1x4x1x8xf32, #tpu.memory_space<vmem>>, vector<1x1x1x8xf32>
    %13 = vector.shape_cast %12 : vector<1x1x1x8xf32> to vector<1x8xf32>
    %14 = vector.broadcast %13 : vector<1x8xf32> to vector<8x8xf32>
    %15 = arith.addf %11, %14 : vector<8x8xf32>
    %cst_19 = arith.constant dense<0xFF800000> : vector<8xf32>
    %16 = vector.multi_reduction <maximumf>, %15, %cst_19 [1] : vector<8x8xf32> to vector<8xf32>
    %17 = vector.shape_cast %16 : vector<8xf32> to vector<8x1xf32>
    %18 = vector.broadcast %17 : vector<8x1xf32> to vector<8x8xf32>
    %19 = arith.subf %15, %18 : vector<8x8xf32>
    %20 = math.exp %19 : vector<8x8xf32>
    %cst_20 = arith.constant dense<0.000000e+00> : vector<8xf32>
    %21 = vector.multi_reduction <add>, %20, %cst_20 [1] : vector<8x8xf32> to vector<8xf32>
    %22 = vector.shape_cast %21 : vector<8xf32> to vector<8x1xf32>
    %23 = tpu.reciprocal %22 : vector<8x1xf32> -> vector<8x1xf32>
    %24 = vector.broadcast %23 : vector<8x1xf32> to vector<8x8xf32>
    %25 = arith.mulf %20, %24 : vector<8x8xf32>
    %c0_21 = arith.constant 0 : index
    %c0_22 = arith.constant 0 : index
    %c0_23 = arith.constant 0 : index
    %26 = vector.load %arg11[%c0_21, %c0_22, %c0_23] : memref<4x8x8xf32, #tpu.memory_space<vmem>>, vector<1x8x8xf32>
    %27 = vector.shape_cast %26 : vector<1x8x8xf32> to vector<8x8xf32>
    %28 = vector.shape_cast %25 : vector<8x8xf32> to vector<1x8x8xf32>
    tpu.vector_store %arg11[%c0_21, %c0_22, %c0_23], %28 {strides = array<i32>} : memref<4x8x8xf32, #tpu.memory_space<vmem>>, vector<1x8x8xf32>,
    %c0_24 = arith.constant 0 : index
    %c0_25 = arith.constant 0 : index
    %c0_26 = arith.constant 0 : index
    %c0_27 = arith.constant 0 : index
    %29 = vector.load %arg4[%c0_24, %c0_25, %c0_26, %c0_27] : memref<1x4x8x8xf32, #tpu.memory_space<vmem>>, vector<1x1x8x8xf32>
    %30 = vector.shape_cast %29 : vector<1x1x8x8xf32> to vector<8x8xf32>
    %cst_28 = arith.constant dense<0.000000e+00> : vector<8x8xf32>
    %31 = tpu.matmul %25, %30, %cst_28 {dimension_numbers = #tpu.dot_dimension_numbers<[1], [0], [0], [1], [0, 0, 1, 1], [], []>} : vector<8x8xf32>, vector<8x8xf32>, vector<8x8xf32> -> vector<8x8xf32>
    %c0_29 = arith.constant 0 : index
    %c0_30 = arith.constant 0 : index
    %c0_31 = arith.constant 0 : index
    %c0_32 = arith.constant 0 : index
    %32 = vector.load %arg5[%c0_29, %c0_30, %c0_31, %c0_32] : memref<1x4x8x6xf32, #tpu.memory_space<vmem>>, vector<1x1x8x6xf32>
    %33 = vector.shape_cast %32 : vector<1x1x8x6xf32> to vector<8x6xf32>
    %cst_33 = arith.constant dense<0.000000e+00> : vector<8x6xf32>
    %34 = tpu.matmul %25, %33, %cst_33 {dimension_numbers = #tpu.dot_dimension_numbers<[1], [0], [0], [1], [0, 0, 1, 1], [], []>} : vector<8x8xf32>, vector<8x6xf32>, vector<8x6xf32> -> vector<8x6xf32>
    %c0_34 = arith.constant 0 : index
    %c0_35 = arith.constant 0 : index
    %c0_36 = arith.constant 0 : index
    %c4 = arith.constant 4 : index
    %35 = vector.load %arg10[%c0_34, %c0_35, %c0_36, %c4] : memref<1x4x8x18xf32, #tpu.memory_space<vmem>>, vector<1x1x8x8xf32>
    %36 = vector.shape_cast %35 : vector<1x1x8x8xf32> to vector<8x8xf32>
    %37 = vector.shape_cast %31 : vector<8x8xf32> to vector<1x1x8x8xf32>
    tpu.vector_store %arg10[%c0_34, %c0_35, %c0_36, %c4], %37 {strides = array<i32>} : memref<1x4x8x18xf32, #tpu.memory_space<vmem>>, vector<1x1x8x8xf32>,
    %c0_37 = arith.constant 0 : index
    %c0_38 = arith.constant 0 : index
    %c0_39 = arith.constant 0 : index
    %c12 = arith.constant 12 : index
    %38 = vector.load %arg10[%c0_37, %c0_38, %c0_39, %c12] : memref<1x4x8x18xf32, #tpu.memory_space<vmem>>, vector<1x1x8x6xf32>
    %39 = vector.shape_cast %38 : vector<1x1x8x6xf32> to vector<8x6xf32>
    %40 = vector.shape_cast %34 : vector<8x6xf32> to vector<1x1x8x6xf32>
    tpu.vector_store %arg10[%c0_37, %c0_38, %c0_39, %c12], %40 {strides = array<i32>} : memref<1x4x8x18xf32, #tpu.memory_space<vmem>>, vector<1x1x8x6xf32>,
    %c0_40 = arith.constant 0 : index
    %c1 = arith.constant 1 : index
    %c0_41 = arith.constant 0 : index
    %c0_42 = arith.constant 0 : index
    %41 = vector.load %arg2[%c0_40, %c1, %c0_41, %c0_42] : memref<1x4x8x20xf32, #tpu.memory_space<vmem>>, vector<1x1x8x20xf32>
    %42 = vector.shape_cast %41 : vector<1x1x8x20xf32> to vector<8x20xf32>
    %c0_43 = arith.constant 0 : index
    %c1_44 = arith.constant 1 : index
    %c0_45 = arith.constant 0 : index
    %c0_46 = arith.constant 0 : index
    %43 = vector.load %arg3[%c0_43, %c1_44, %c0_45, %c0_46] : memref<1x4x8x20xf32, #tpu.memory_space<vmem>>, vector<1x1x8x20xf32>
    %44 = vector.shape_cast %43 : vector<1x1x8x20xf32> to vector<8x20xf32>
    %cst_47 = arith.constant dense<0.000000e+00> : vector<8x8xf32>
    %45 = tpu.matmul %42, %44, %cst_47 {dimension_numbers = #tpu.dot_dimension_numbers<[1], [1], [0], [0], [0, 0, 1, 0], [], []>} : vector<8x20xf32>, vector<8x20xf32>, vector<8x8xf32> -> vector<8x8xf32>
    %c0_48 = arith.constant 0 : index
    %c1_49 = arith.constant 1 : index
    %c0_50 = arith.constant 0 : index
    %c0_51 = arith.constant 0 : index
    %46 = vector.load %arg6[%c0_48, %c1_49, %c0_50, %c0_51] : memref<1x4x8x8xf32, #tpu.memory_space<vmem>>, vector<1x1x8x8xf32>
    %47 = vector.shape_cast %46 : vector<1x1x8x8xf32> to vector<8x8xf32>
    %48 = arith.addf %45, %47 : vector<8x8xf32>
    %c0_52 = arith.constant 0 : index
    %c1_53 = arith.constant 1 : index
    %c0_54 = arith.constant 0 : index
    %c0_55 = arith.constant 0 : index
    %49 = vector.load %arg7[%c0_52, %c1_53, %c0_54, %c0_55] : memref<1x4x8x1xf32, #tpu.memory_space<vmem>>, vector<1x1x8x1xf32>
    %50 = vector.shape_cast %49 : vector<1x1x8x1xf32> to vector<8x1xf32>
    %51 = vector.broadcast %50 : vector<8x1xf32> to vector<8x8xf32>
    %52 = arith.addf %48, %51 : vector<8x8xf32>
    %c0_56 = arith.constant 0 : index
    %c1_57 = arith.constant 1 : index
    %c0_58 = arith.constant 0 : index
    %c0_59 = arith.constant 0 : index
    %53 = vector.load %arg8[%c0_56, %c1_57, %c0_58, %c0_59] : memref<1x4x1x8xf32, #tpu.memory_space<vmem>>, vector<1x1x1x8xf32>
    %54 = vector.shape_cast %53 : vector<1x1x1x8xf32> to vector<1x8xf32>
    %55 = vector.broadcast %54 : vector<1x8xf32> to vector<8x8xf32>
    %56 = arith.addf %52, %55 : vector<8x8xf32>
    %cst_60 = arith.constant dense<0xFF800000> : vector<8xf32>
    %57 = vector.multi_reduction <maximumf>, %56, %cst_60 [1] : vector<8x8xf32> to vector<8xf32>
    %58 = vector.shape_cast %57 : vector<8xf32> to vector<8x1xf32>
    %59 = vector.broadcast %58 : vector<8x1xf32> to vector<8x8xf32>
    %60 = arith.subf %56, %59 : vector<8x8xf32>
    %61 = math.exp %60 : vector<8x8xf32>
    %cst_61 = arith.constant dense<0.000000e+00> : vector<8xf32>
    %62 = vector.multi_reduction <add>, %61, %cst_61 [1] : vector<8x8xf32> to vector<8xf32>
    %63 = vector.shape_cast %62 : vector<8xf32> to vector<8x1xf32>
    %64 = tpu.reciprocal %63 : vector<8x1xf32> -> vector<8x1xf32>
    %65 = vector.broadcast %64 : vector<8x1xf32> to vector<8x8xf32>
    %66 = arith.mulf %61, %65 : vector<8x8xf32>
    %c1_62 = arith.constant 1 : index
    %c0_63 = arith.constant 0 : index
    %c0_64 = arith.constant 0 : index
    %67 = vector.load %arg11[%c1_62, %c0_63, %c0_64] : memref<4x8x8xf32, #tpu.memory_space<vmem>>, vector<1x8x8xf32>
    %68 = vector.shape_cast %67 : vector<1x8x8xf32> to vector<8x8xf32>
    %69 = vector.shape_cast %66 : vector<8x8xf32> to vector<1x8x8xf32>
    tpu.vector_store %arg11[%c1_62, %c0_63, %c0_64], %69 {strides = array<i32>} : memref<4x8x8xf32, #tpu.memory_space<vmem>>, vector<1x8x8xf32>,
    %c0_65 = arith.constant 0 : index
    %c1_66 = arith.constant 1 : index
    %c0_67 = arith.constant 0 : index
    %c0_68 = arith.constant 0 : index
    %70 = vector.load %arg4[%c0_65, %c1_66, %c0_67, %c0_68] : memref<1x4x8x8xf32, #tpu.memory_space<vmem>>, vector<1x1x8x8xf32>
    %71 = vector.shape_cast %70 : vector<1x1x8x8xf32> to vector<8x8xf32>
    %cst_69 = arith.constant dense<0.000000e+00> : vector<8x8xf32>
    %72 = tpu.matmul %66, %71, %cst_69 {dimension_numbers = #tpu.dot_dimension_numbers<[1], [0], [0], [1], [0, 0, 1, 1], [], []>} : vector<8x8xf32>, vector<8x8xf32>, vector<8x8xf32> -> vector<8x8xf32>
    %c0_70 = arith.constant 0 : index
    %c1_71 = arith.constant 1 : index
    %c0_72 = arith.constant 0 : index
    %c0_73 = arith.constant 0 : index
    %73 = vector.load %arg5[%c0_70, %c1_71, %c0_72, %c0_73] : memref<1x4x8x6xf32, #tpu.memory_space<vmem>>, vector<1x1x8x6xf32>
    %74 = vector.shape_cast %73 : vector<1x1x8x6xf32> to vector<8x6xf32>
    %cst_74 = arith.constant dense<0.000000e+00> : vector<8x6xf32>
    %75 = tpu.matmul %66, %74, %cst_74 {dimension_numbers = #tpu.dot_dimension_numbers<[1], [0], [0], [1], [0, 0, 1, 1], [], []>} : vector<8x8xf32>, vector<8x6xf32>, vector<8x6xf32> -> vector<8x6xf32>
    %c0_75 = arith.constant 0 : index
    %c1_76 = arith.constant 1 : index
    %c0_77 = arith.constant 0 : index
    %c4_78 = arith.constant 4 : index
    %76 = vector.load %arg10[%c0_75, %c1_76, %c0_77, %c4_78] : memref<1x4x8x18xf32, #tpu.memory_space<vmem>>, vector<1x1x8x8xf32>
    %77 = vector.shape_cast %76 : vector<1x1x8x8xf32> to vector<8x8xf32>
    %78 = vector.shape_cast %72 : vector<8x8xf32> to vector<1x1x8x8xf32>
    tpu.vector_store %arg10[%c0_75, %c1_76, %c0_77, %c4_78], %78 {strides = array<i32>} : memref<1x4x8x18xf32, #tpu.memory_space<vmem>>, vector<1x1x8x8xf32>,
    %c0_79 = arith.constant 0 : index
    %c1_80 = arith.constant 1 : index
    %c0_81 = arith.constant 0 : index
    %c12_82 = arith.constant 12 : index
    %79 = vector.load %arg10[%c0_79, %c1_80, %c0_81, %c12_82] : memref<1x4x8x18xf32, #tpu.memory_space<vmem>>, vector<1x1x8x6xf32>
    %80 = vector.shape_cast %79 : vector<1x1x8x6xf32> to vector<8x6xf32>
    %81 = vector.shape_cast %75 : vector<8x6xf32> to vector<1x1x8x6xf32>
    tpu.vector_store %arg10[%c0_79, %c1_80, %c0_81, %c12_82], %81 {strides = array<i32>} : memref<1x4x8x18xf32, #tpu.memory_space<vmem>>, vector<1x1x8x6xf32>,
    %c0_83 = arith.constant 0 : index
    %c2 = arith.constant 2 : index
    %c0_84 = arith.constant 0 : index
    %c0_85 = arith.constant 0 : index
    %82 = vector.load %arg2[%c0_83, %c2, %c0_84, %c0_85] : memref<1x4x8x20xf32, #tpu.memory_space<vmem>>, vector<1x1x8x20xf32>
    %83 = vector.shape_cast %82 : vector<1x1x8x20xf32> to vector<8x20xf32>
    %c0_86 = arith.constant 0 : index
    %c2_87 = arith.constant 2 : index
    %c0_88 = arith.constant 0 : index
    %c0_89 = arith.constant 0 : index
    %84 = vector.load %arg3[%c0_86, %c2_87, %c0_88, %c0_89] : memref<1x4x8x20xf32, #tpu.memory_space<vmem>>, vector<1x1x8x20xf32>
    %85 = vector.shape_cast %84 : vector<1x1x8x20xf32> to vector<8x20xf32>
    %cst_90 = arith.constant dense<0.000000e+00> : vector<8x8xf32>
    %86 = tpu.matmul %83, %85, %cst_90 {dimension_numbers = #tpu.dot_dimension_numbers<[1], [1], [0], [0], [0, 0, 1, 0], [], []>} : vector<8x20xf32>, vector<8x20xf32>, vector<8x8xf32> -> vector<8x8xf32>
    %c0_91 = arith.constant 0 : index
    %c2_92 = arith.constant 2 : index
    %c0_93 = arith.constant 0 : index
    %c0_94 = arith.constant 0 : index
    %87 = vector.load %arg6[%c0_91, %c2_92, %c0_93, %c0_94] : memref<1x4x8x8xf32, #tpu.memory_space<vmem>>, vector<1x1x8x8xf32>
    %88 = vector.shape_cast %87 : vector<1x1x8x8xf32> to vector<8x8xf32>
    %89 = arith.addf %86, %88 : vector<8x8xf32>
    %c0_95 = arith.constant 0 : index
    %c2_96 = arith.constant 2 : index
    %c0_97 = arith.constant 0 : index
    %c0_98 = arith.constant 0 : index
    %90 = vector.load %arg7[%c0_95, %c2_96, %c0_97, %c0_98] : memref<1x4x8x1xf32, #tpu.memory_space<vmem>>, vector<1x1x8x1xf32>
    %91 = vector.shape_cast %90 : vector<1x1x8x1xf32> to vector<8x1xf32>
    %92 = vector.broadcast %91 : vector<8x1xf32> to vector<8x8xf32>
    %93 = arith.addf %89, %92 : vector<8x8xf32>
    %c0_99 = arith.constant 0 : index
    %c2_100 = arith.constant 2 : index
    %c0_101 = arith.constant 0 : index
    %c0_102 = arith.constant 0 : index
    %94 = vector.load %arg8[%c0_99, %c2_100, %c0_101, %c0_102] : memref<1x4x1x8xf32, #tpu.memory_space<vmem>>, vector<1x1x1x8xf32>
    %95 = vector.shape_cast %94 : vector<1x1x1x8xf32> to vector<1x8xf32>
    %96 = vector.broadcast %95 : vector<1x8xf32> to vector<8x8xf32>
    %97 = arith.addf %93, %96 : vector<8x8xf32>
    %cst_103 = arith.constant dense<0xFF800000> : vector<8xf32>
    %98 = vector.multi_reduction <maximumf>, %97, %cst_103 [1] : vector<8x8xf32> to vector<8xf32>
    %99 = vector.shape_cast %98 : vector<8xf32> to vector<8x1xf32>
    %100 = vector.broadcast %99 : vector<8x1xf32> to vector<8x8xf32>
    %101 = arith.subf %97, %100 : vector<8x8xf32>
    %102 = math.exp %101 : vector<8x8xf32>
    %cst_104 = arith.constant dense<0.000000e+00> : vector<8xf32>
    %103 = vector.multi_reduction <add>, %102, %cst_104 [1] : vector<8x8xf32> to vector<8xf32>
    %104 = vector.shape_cast %103 : vector<8xf32> to vector<8x1xf32>
    %105 = tpu.reciprocal %104 : vector<8x1xf32> -> vector<8x1xf32>
    %106 = vector.broadcast %105 : vector<8x1xf32> to vector<8x8xf32>
    %107 = arith.mulf %102, %106 : vector<8x8xf32>
    %c2_105 = arith.constant 2 : index
    %c0_106 = arith.constant 0 : index
    %c0_107 = arith.constant 0 : index
    %108 = vector.load %arg11[%c2_105, %c0_106, %c0_107] : memref<4x8x8xf32, #tpu.memory_space<vmem>>, vector<1x8x8xf32>
    %109 = vector.shape_cast %108 : vector<1x8x8xf32> to vector<8x8xf32>
    %110 = vector.shape_cast %107 : vector<8x8xf32> to vector<1x8x8xf32>
    tpu.vector_store %arg11[%c2_105, %c0_106, %c0_107], %110 {strides = array<i32>} : memref<4x8x8xf32, #tpu.memory_space<vmem>>, vector<1x8x8xf32>,
    %c0_108 = arith.constant 0 : index
    %c2_109 = arith.constant 2 : index
    %c0_110 = arith.constant 0 : index
    %c0_111 = arith.constant 0 : index
    %111 = vector.load %arg4[%c0_108, %c2_109, %c0_110, %c0_111] : memref<1x4x8x8xf32, #tpu.memory_space<vmem>>, vector<1x1x8x8xf32>
    %112 = vector.shape_cast %111 : vector<1x1x8x8xf32> to vector<8x8xf32>
    %cst_112 = arith.constant dense<0.000000e+00> : vector<8x8xf32>
    %113 = tpu.matmul %107, %112, %cst_112 {dimension_numbers = #tpu.dot_dimension_numbers<[1], [0], [0], [1], [0, 0, 1, 1], [], []>} : vector<8x8xf32>, vector<8x8xf32>, vector<8x8xf32> -> vector<8x8xf32>
    %c0_113 = arith.constant 0 : index
    %c2_114 = arith.constant 2 : index
    %c0_115 = arith.constant 0 : index
    %c0_116 = arith.constant 0 : index
    %114 = vector.load %arg5[%c0_113, %c2_114, %c0_115, %c0_116] : memref<1x4x8x6xf32, #tpu.memory_space<vmem>>, vector<1x1x8x6xf32>
    %115 = vector.shape_cast %114 : vector<1x1x8x6xf32> to vector<8x6xf32>
    %cst_117 = arith.constant dense<0.000000e+00> : vector<8x6xf32>
    %116 = tpu.matmul %107, %115, %cst_117 {dimension_numbers = #tpu.dot_dimension_numbers<[1], [0], [0], [1], [0, 0, 1, 1], [], []>} : vector<8x8xf32>, vector<8x6xf32>, vector<8x6xf32> -> vector<8x6xf32>
    %c0_118 = arith.constant 0 : index
    %c2_119 = arith.constant 2 : index
    %c0_120 = arith.constant 0 : index
    %c4_121 = arith.constant 4 : index
    %117 = vector.load %arg10[%c0_118, %c2_119, %c0_120, %c4_121] : memref<1x4x8x18xf32, #tpu.memory_space<vmem>>, vector<1x1x8x8xf32>
    %118 = vector.shape_cast %117 : vector<1x1x8x8xf32> to vector<8x8xf32>
    %119 = vector.shape_cast %113 : vector<8x8xf32> to vector<1x1x8x8xf32>
    tpu.vector_store %arg10[%c0_118, %c2_119, %c0_120, %c4_121], %119 {strides = array<i32>} : memref<1x4x8x18xf32, #tpu.memory_space<vmem>>, vector<1x1x8x8xf32>,
    %c0_122 = arith.constant 0 : index
    %c2_123 = arith.constant 2 : index
    %c0_124 = arith.constant 0 : index
    %c12_125 = arith.constant 12 : index
    %120 = vector.load %arg10[%c0_122, %c2_123, %c0_124, %c12_125] : memref<1x4x8x18xf32, #tpu.memory_space<vmem>>, vector<1x1x8x6xf32>
    %121 = vector.shape_cast %120 : vector<1x1x8x6xf32> to vector<8x6xf32>
    %122 = vector.shape_cast %116 : vector<8x6xf32> to vector<1x1x8x6xf32>
    tpu.vector_store %arg10[%c0_122, %c2_123, %c0_124, %c12_125], %122 {strides = array<i32>} : memref<1x4x8x18xf32, #tpu.memory_space<vmem>>, vector<1x1x8x6xf32>,
    %c0_126 = arith.constant 0 : index
    %c3 = arith.constant 3 : index
    %c0_127 = arith.constant 0 : index
    %c0_128 = arith.constant 0 : index
    %123 = vector.load %arg2[%c0_126, %c3, %c0_127, %c0_128] : memref<1x4x8x20xf32, #tpu.memory_space<vmem>>, vector<1x1x8x20xf32>
    %124 = vector.shape_cast %123 : vector<1x1x8x20xf32> to vector<8x20xf32>
    %c0_129 = arith.constant 0 : index
    %c3_130 = arith.constant 3 : index
    %c0_131 = arith.constant 0 : index
    %c0_132 = arith.constant 0 : index
    %125 = vector.load %arg3[%c0_129, %c3_130, %c0_131, %c0_132] : memref<1x4x8x20xf32, #tpu.memory_space<vmem>>, vector<1x1x8x20xf32>
    %126 = vector.shape_cast %125 : vector<1x1x8x20xf32> to vector<8x20xf32>
    %cst_133 = arith.constant dense<0.000000e+00> : vector<8x8xf32>
    %127 = tpu.matmul %124, %126, %cst_133 {dimension_numbers = #tpu.dot_dimension_numbers<[1], [1], [0], [0], [0, 0, 1, 0], [], []>} : vector<8x20xf32>, vector<8x20xf32>, vector<8x8xf32> -> vector<8x8xf32>
    %c0_134 = arith.constant 0 : index
    %c3_135 = arith.constant 3 : index
    %c0_136 = arith.constant 0 : index
    %c0_137 = arith.constant 0 : index
    %128 = vector.load %arg6[%c0_134, %c3_135, %c0_136, %c0_137] : memref<1x4x8x8xf32, #tpu.memory_space<vmem>>, vector<1x1x8x8xf32>
    %129 = vector.shape_cast %128 : vector<1x1x8x8xf32> to vector<8x8xf32>
    %130 = arith.addf %127, %129 : vector<8x8xf32>
    %c0_138 = arith.constant 0 : index
    %c3_139 = arith.constant 3 : index
    %c0_140 = arith.constant 0 : index
    %c0_141 = arith.constant 0 : index
    %131 = vector.load %arg7[%c0_138, %c3_139, %c0_140, %c0_141] : memref<1x4x8x1xf32, #tpu.memory_space<vmem>>, vector<1x1x8x1xf32>
    %132 = vector.shape_cast %131 : vector<1x1x8x1xf32> to vector<8x1xf32>
    %133 = vector.broadcast %132 : vector<8x1xf32> to vector<8x8xf32>
    %134 = arith.addf %130, %133 : vector<8x8xf32>
    %c0_142 = arith.constant 0 : index
    %c3_143 = arith.constant 3 : index
    %c0_144 = arith.constant 0 : index
    %c0_145 = arith.constant 0 : index
    %135 = vector.load %arg8[%c0_142, %c3_143, %c0_144, %c0_145] : memref<1x4x1x8xf32, #tpu.memory_space<vmem>>, vector<1x1x1x8xf32>
    %136 = vector.shape_cast %135 : vector<1x1x1x8xf32> to vector<1x8xf32>
    %137 = vector.broadcast %136 : vector<1x8xf32> to vector<8x8xf32>
    %138 = arith.addf %134, %137 : vector<8x8xf32>
    %cst_146 = arith.constant dense<0xFF800000> : vector<8xf32>
    %139 = vector.multi_reduction <maximumf>, %138, %cst_146 [1] : vector<8x8xf32> to vector<8xf32>
    %140 = vector.shape_cast %139 : vector<8xf32> to vector<8x1xf32>
    %141 = vector.broadcast %140 : vector<8x1xf32> to vector<8x8xf32>
    %142 = arith.subf %138, %141 : vector<8x8xf32>
    %143 = math.exp %142 : vector<8x8xf32>
    %cst_147 = arith.constant dense<0.000000e+00> : vector<8xf32>
    %144 = vector.multi_reduction <add>, %143, %cst_147 [1] : vector<8x8xf32> to vector<8xf32>
    %145 = vector.shape_cast %144 : vector<8xf32> to vector<8x1xf32>
    %146 = tpu.reciprocal %145 : vector<8x1xf32> -> vector<8x1xf32>
    %147 = vector.broadcast %146 : vector<8x1xf32> to vector<8x8xf32>
    %148 = arith.mulf %143, %147 : vector<8x8xf32>
    %c3_148 = arith.constant 3 : index
    %c0_149 = arith.constant 0 : index
    %c0_150 = arith.constant 0 : index
    %149 = vector.load %arg11[%c3_148, %c0_149, %c0_150] : memref<4x8x8xf32, #tpu.memory_space<vmem>>, vector<1x8x8xf32>
    %150 = vector.shape_cast %149 : vector<1x8x8xf32> to vector<8x8xf32>
    %151 = vector.shape_cast %148 : vector<8x8xf32> to vector<1x8x8xf32>
    tpu.vector_store %arg11[%c3_148, %c0_149, %c0_150], %151 {strides = array<i32>} : memref<4x8x8xf32, #tpu.memory_space<vmem>>, vector<1x8x8xf32>,
    %c0_151 = arith.constant 0 : index
    %c3_152 = arith.constant 3 : index
    %c0_153 = arith.constant 0 : index
    %c0_154 = arith.constant 0 : index
    %152 = vector.load %arg4[%c0_151, %c3_152, %c0_153, %c0_154] : memref<1x4x8x8xf32, #tpu.memory_space<vmem>>, vector<1x1x8x8xf32>
    %153 = vector.shape_cast %152 : vector<1x1x8x8xf32> to vector<8x8xf32>
    %cst_155 = arith.constant dense<0.000000e+00> : vector<8x8xf32>
    %154 = tpu.matmul %148, %153, %cst_155 {dimension_numbers = #tpu.dot_dimension_numbers<[1], [0], [0], [1], [0, 0, 1, 1], [], []>} : vector<8x8xf32>, vector<8x8xf32>, vector<8x8xf32> -> vector<8x8xf32>
    %c0_156 = arith.constant 0 : index
    %c3_157 = arith.constant 3 : index
    %c0_158 = arith.constant 0 : index
    %c0_159 = arith.constant 0 : index
    %155 = vector.load %arg5[%c0_156, %c3_157, %c0_158, %c0_159] : memref<1x4x8x6xf32, #tpu.memory_space<vmem>>, vector<1x1x8x6xf32>
    %156 = vector.shape_cast %155 : vector<1x1x8x6xf32> to vector<8x6xf32>
    %cst_160 = arith.constant dense<0.000000e+00> : vector<8x6xf32>
    %157 = tpu.matmul %148, %156, %cst_160 {dimension_numbers = #tpu.dot_dimension_numbers<[1], [0], [0], [1], [0, 0, 1, 1], [], []>} : vector<8x8xf32>, vector<8x6xf32>, vector<8x6xf32> -> vector<8x6xf32>
    %c0_161 = arith.constant 0 : index
    %c3_162 = arith.constant 3 : index
    %c0_163 = arith.constant 0 : index
    %c4_164 = arith.constant 4 : index
    %158 = vector.load %arg10[%c0_161, %c3_162, %c0_163, %c4_164] : memref<1x4x8x18xf32, #tpu.memory_space<vmem>>, vector<1x1x8x8xf32>
    %159 = vector.shape_cast %158 : vector<1x1x8x8xf32> to vector<8x8xf32>
    %160 = vector.shape_cast %154 : vector<8x8xf32> to vector<1x1x8x8xf32>
    tpu.vector_store %arg10[%c0_161, %c3_162, %c0_163, %c4_164], %160 {strides = array<i32>} : memref<1x4x8x18xf32, #tpu.memory_space<vmem>>, vector<1x1x8x8xf32>,
    %c0_165 = arith.constant 0 : index
    %c3_166 = arith.constant 3 : index
    %c0_167 = arith.constant 0 : index
    %c12_168 = arith.constant 12 : index
    %161 = vector.load %arg10[%c0_165, %c3_166, %c0_167, %c12_168] : memref<1x4x8x18xf32, #tpu.memory_space<vmem>>, vector<1x1x8x6xf32>
    %162 = vector.shape_cast %161 : vector<1x1x8x6xf32> to vector<8x6xf32>
    %163 = vector.shape_cast %157 : vector<8x6xf32> to vector<1x1x8x6xf32>
    tpu.vector_store %arg10[%c0_165, %c3_166, %c0_167, %c12_168], %163 {strides = array<i32>} : memref<1x4x8x18xf32, #tpu.memory_space<vmem>>, vector<1x1x8x6xf32>,
    %c0_169 = arith.constant 0 : index
    %c0_170 = arith.constant 0 : index
    %c0_171 = arith.constant 0 : index
    %164 = vector.load %arg11[%c0_169, %c0_170, %c0_171] : memref<4x8x8xf32, #tpu.memory_space<vmem>>, vector<4x8x8xf32>
    %165 = tpu.transpose %164, [1, 0, 2] : vector<4x8x8xf32> -> vector<8x4x8xf32>
    %c0_172 = arith.constant 0 : index
    %c0_173 = arith.constant 0 : index
    %c0_174 = arith.constant 0 : index
    %c0_175 = arith.constant 0 : index
    %166 = vector.load %arg9[%c0_172, %c0_173, %c0_174, %c0_175] : memref<1x8x8x4xf32, #tpu.memory_space<vmem>>, vector<1x8x8x4xf32>
    %167 = vector.shape_cast %166 : vector<1x8x8x4xf32> to vector<8x8x4xf32>
    %cst_176 = arith.constant dense<0.000000e+00> : vector<8x4x4xf32>
    %168 = tpu.matmul %165, %167, %cst_176 {dimension_numbers = #tpu.dot_dimension_numbers<[2], [1], [1], [2], [0, 0, 0, 1, 1, 2], [0], [0]>} : vector<8x4x8xf32>, vector<8x8x4xf32>, vector<8x4x4xf32> -> vector<8x4x4xf32>
    %169 = tpu.transpose %168, [1, 0, 2] : vector<8x4x4xf32> -> vector<4x8x4xf32>
    %c0_177 = arith.constant 0 : index
    %c0_178 = arith.constant 0 : index
    %c0_179 = arith.constant 0 : index
    %c0_180 = arith.constant 0 : index
    %170 = vector.load %arg10[%c0_177, %c0_178, %c0_179, %c0_180] : memref<1x4x8x18xf32, #tpu.memory_space<vmem>>, vector<1x4x8x4xf32>
    %171 = vector.shape_cast %170 : vector<1x4x8x4xf32> to vector<4x8x4xf32>
    %172 = vector.shape_cast %169 : vector<4x8x4xf32> to vector<1x4x8x4xf32>
    tpu.vector_store %arg10[%c0_177, %c0_178, %c0_179, %c0_180], %172 {strides = array<i32>} : memref<1x4x8x18xf32, #tpu.memory_space<vmem>>, vector<1x4x8x4xf32>,
    return
  }
  func.func @transform_0(%arg0: i32, %arg1: i32) -> (i32, i32, i32, i32) {
    %c0_i32 = arith.constant 0 : i32
    %c0_i32_0 = arith.constant 0 : i32
    %c0_i32_1 = arith.constant 0 : i32
    return %arg0, %c0_i32, %arg1, %c0_i32_0 : i32, i32, i32, i32
  }
  func.func @transform_1(%arg0: i32, %arg1: i32) -> (i32, i32, i32, i32) {
    %c0_i32 = arith.constant 0 : i32
    %c0_i32_0 = arith.constant 0 : i32
    %c0_i32_1 = arith.constant 0 : i32
    %c0_i32_2 = arith.constant 0 : i32
    return %arg0, %c0_i32, %c0_i32_0, %c0_i32_1 : i32, i32, i32, i32
  }
  func.func @transform_2(%arg0: i32, %arg1: i32) -> (i32, i32, i32, i32) {
    %c0_i32 = arith.constant 0 : i32
    %c0_i32_0 = arith.constant 0 : i32
    %c0_i32_1 = arith.constant 0 : i32
    %c0_i32_2 = arith.constant 0 : i32
    return %arg0, %c0_i32, %c0_i32_0, %c0_i32_1 : i32, i32, i32, i32
  }
  func.func @transform_3(%arg0: i32, %arg1: i32) -> (i32, i32, i32, i32) {
    %c0_i32 = arith.constant 0 : i32
    %c0_i32_0 = arith.constant 0 : i32
    %c0_i32_1 = arith.constant 0 : i32
    %c0_i32_2 = arith.constant 0 : i32
    return %arg0, %c0_i32, %c0_i32_0, %c0_i32_1 : i32, i32, i32, i32
  }
  func.func @transform_4(%arg0: i32, %arg1: i32) -> (i32, i32, i32, i32) {
    %c0_i32 = arith.constant 0 : i32
    %c0_i32_0 = arith.constant 0 : i32
    %c0_i32_1 = arith.constant 0 : i32
    return %arg0, %c0_i32, %arg1, %c0_i32_0 : i32, i32, i32, i32
  }
  func.func @transform_5(%arg0: i32, %arg1: i32) -> (i32, i32, i32, i32) {
    %c0_i32 = arith.constant 0 : i32
    %c0_i32_0 = arith.constant 0 : i32
    %c0_i32_1 = arith.constant 0 : i32
    return %arg0, %c0_i32, %arg1, %c0_i32_0 : i32, i32, i32, i32
  }
  func.func @transform_6(%arg0: i32, %arg1: i32) -> (i32, i32, i32, i32) {
    %c0_i32 = arith.constant 0 : i32
    %c0_i32_0 = arith.constant 0 : i32
    %c0_i32_1 = arith.constant 0 : i32
    %c0_i32_2 = arith.constant 0 : i32
    return %arg0, %c0_i32, %c0_i32_0, %c0_i32_1 : i32, i32, i32, i32
  }
  func.func @transform_7(%arg0: i32, %arg1: i32) -> (i32, i32, i32, i32) {
    %c0_i32 = arith.constant 0 : i32
    %c0_i32_0 = arith.constant 0 : i32
    %c0_i32_1 = arith.constant 0 : i32
    return %arg0, %arg1, %c0_i32, %c0_i32_0 : i32, i32, i32, i32
  }
  func.func @transform_8(%arg0: i32, %arg1: i32) -> (i32, i32, i32, i32) {
    %c0_i32 = arith.constant 0 : i32
    %c0_i32_0 = arith.constant 0 : i32
    %c0_i32_1 = arith.constant 0 : i32
    return %arg0, %c0_i32, %arg1, %c0_i32_0 : i32, i32, i32, i32
  }
}

</mosaic_0001>

<llo_original>
// kernel: tpu_custom_call.1
$region0: #{tpu_custom_call.1}
  #allocation0 [shape = 'u32[]', space=smem, size = 0x4, offset = 0x4, fixed_abs, tag = 'smem constant byte address 0x4 - core index']
  #allocation1 [shape = 'u32[144,128]{1,0:T(1,128)}', space=vmem, size = 0x12000, scoped, tag = 'internal scratch']
  #allocation2 [shape = 'f32[4,8,8]{2,1,0:T(8,128)}', space=vmem, size = 0x4000, scoped, tag = 'scratch operand']
  %s0 = inlined_call_operand.vmem [shape: f32[2,4,8,20], index: 0, kind: input, shape index: {}]
  %s1 = inlined_call_operand.vmem [shape: f32[2,4,8,20], index: 1, kind: input, shape index: {}]
  %s2 = inlined_call_operand.vmem [shape: f32[2,4,8,8], index: 2, kind: input, shape index: {}]
  %s3 = inlined_call_operand.vmem [shape: f32[2,4,8,6], index: 3, kind: input, shape index: {}]
  %s4 = inlined_call_operand.vmem [shape: f32[2,4,8,8], index: 4, kind: input, shape index: {}]
  %s5 = inlined_call_operand.vmem [shape: f32[2,4,8,1], index: 5, kind: input, shape index: {}]
  %s6 = inlined_call_operand.vmem [shape: f32[2,4,1,8], index: 6, kind: input, shape index: {}]
  %s7 = inlined_call_operand.vmem [shape: f32[2,8,8,4], index: 7, kind: input, shape index: {}]
  %s8 = inlined_call_operand.hbm [shape: f32[2,4,8,18], index: 8, kind: output, shape index: {}]
  %s9 = sld [smem:[#allocation0]]
  $region65: #{tpu_custom_call.1} parent=0
    _
  %s11 = ssub.s32 1, %s9
  %s12 = scalar_select 0, %s11, %s9
  $region1: #{tpu_custom_call.1} parent=0
    #allocation3 [shape = 'u8[32768]{0}', space=vmem, size = 0x8000, scoped, tag = 'output window, operand 0']
    #allocation4 [shape = 's32[2]{0}', space=sflag, size = 0x8, scoped, tag = 'scoped memory for tpu_custom_call.1']
    %13 = vsyncpa [#allocation4], 0
    %s14 = scalar_lea.sflag [#allocation4], 1
    %15 = vsyncpa %s14, 0
    loop: start=0, step=1, limit=4
    $region2: #{tpu_custom_call.1} parent=1 // loop_pre_header
      _
    $region3: #{tpu_custom_call.1} parent=1 // loop_header
      %s17 = sphi 0, %s21
      %p18 = scmp.ge.s32.totalorder %s17, 4
      %s24 = sphi 0, %s36
      %s25 = sphi 0, %s32
      %s26 = sphi 0, %s24
      %s27 = sphi 0, %s25
      %s28 = sphi 0, %s26
      %s29 = sphi 0, %s27
      %s41 = sphi 0, %s43
      %s44 = sphi 0, %s41
      %s45 = sphi 0, %s44
      %s61 = sphi 0, %s45
      %s67 = sphi 0, %s69
      %s70 = sphi 0, %s67
      %s71 = sphi 0, %s70
      %s87 = sphi 0, %s71
      %s93 = sphi 0, %s95
      %s96 = sphi 0, %s93
      %s97 = sphi 0, %s96
      %s113 = sphi 0, %s97
      %s119 = sphi 0, %s121
      %s122 = sphi 0, %s119
      %s123 = sphi 0, %s122
      %s139 = sphi 0, %s123
      %s147 = sphi 0, %s149
      %s150 = sphi 0, %s147
      %s151 = sphi 0, %s150
      %s167 = sphi 0, %s151
      %s175 = sphi 0, %s177
      %s178 = sphi 0, %s175
      %s179 = sphi 0, %s178
      %s195 = sphi 0, %s179
      %s201 = sphi 0, %s203
      %s204 = sphi 0, %s201
      %s205 = sphi 0, %s204
      %s221 = sphi 0, %s205
      %s229 = sphi 0, %s231
      %s232 = sphi 0, %s229
      %s233 = sphi 0, %s232
      %s249 = sphi 0, %s233
      %s257 = sphi 0, %s259
      %s260 = sphi 0, %s257
      %s261 = sphi 0, %s260
      %s277 = sphi 0, %s261
    $region4: #{tpu_custom_call.1} parent=1 // loop_header_branch
      %20 = sbr.rel (%p18) target = $region8
    $region5: #{tpu_custom_call.1} parent=1 // loop_body
      %s22 = ssub.s32 %s17, 1
      %s23 = ssub.s32 %s17, 2
      %s30 = sadd.s32 1, %s25
      %p31 = scmp.ge.s32.totalorder %s30, 1
      %s32 = scalar_select %p31, 0, %s30
      %s33 = sadd.s32 1, %s24
      %s34 = scalar_select %p31, %s33, %s24
      %p35 = scmp.ge.s32.totalorder %s34, 2
      %s36 = scalar_select %p35, 0, %s34
      %s37 = ssub.s32 %s24, %s36
      %s38 = ssub.s32 %s25, %s32
      %s39 = sor.u32 %s37, %s38
      %p40 = scmp.eq.s32.totalorder %s39, 0
      %s42 = sadd.s32 %s41, 1
      %s43 = scalar_select %p40, %s41, %s42
      %p46 = pneg %p40
      %p47 = scmp.eq.s32.totalorder %s17, 1
      %p48 = por %p46, %p47
      %p49 = scmp.ne.s32.totalorder %s41, %s44
      %p50 = scmp.eq.s32.totalorder %s17, 0
      %p51 = por %p49, %p50
      %p52 = scmp.ne.s32.totalorder %s41, %s44
      %p53 = scmp.eq.s32.totalorder %s22, 1
      %p54 = por %p52, %p53
      %p55 = scmp.ne.s32.totalorder %s44, %s45
      %p56 = scmp.eq.s32.totalorder %s22, 0
      %p57 = por %p55, %p56
      %p58 = scmp.ne.s32.totalorder %s44, %s45
      %p59 = scmp.eq.s32.totalorder %s23, 1
      %p60 = por %p58, %p59
      %p62 = scmp.ne.s32.totalorder %s45, %s61
      %p63 = scmp.eq.s32.totalorder %s23, 0
      %p64 = por %p62, %p63
      %s65 = ssub.s32 %s24, %s36
      %p66 = scmp.eq.s32.totalorder %s65, 0
      %s68 = sadd.s32 %s67, 1
      %s69 = scalar_select %p66, %s67, %s68
      %p72 = pneg %p66
      %p73 = scmp.eq.s32.totalorder %s17, 1
      %p74 = por %p72, %p73
      %p75 = scmp.ne.s32.totalorder %s67, %s70
      %p76 = scmp.eq.s32.totalorder %s17, 0
      %p77 = por %p75, %p76
      %p78 = scmp.ne.s32.totalorder %s67, %s70
      %p79 = scmp.eq.s32.totalorder %s22, 1
      %p80 = por %p78, %p79
      %p81 = scmp.ne.s32.totalorder %s70, %s71
      %p82 = scmp.eq.s32.totalorder %s22, 0
      %p83 = por %p81, %p82
      %p84 = scmp.ne.s32.totalorder %s70, %s71
      %p85 = scmp.eq.s32.totalorder %s23, 1
      %p86 = por %p84, %p85
      %p88 = scmp.ne.s32.totalorder %s71, %s87
      %p89 = scmp.eq.s32.totalorder %s23, 0
      %p90 = por %p88, %p89
      %s91 = ssub.s32 %s24, %s36
      %p92 = scmp.eq.s32.totalorder %s91, 0
      %s94 = sadd.s32 %s93, 1
      %s95 = scalar_select %p92, %s93, %s94
      %p98 = pneg %p92
      %p99 = scmp.eq.s32.totalorder %s17, 1
      %p100 = por %p98, %p99
      %p101 = scmp.ne.s32.totalorder %s93, %s96
      %p102 = scmp.eq.s32.totalorder %s17, 0
      %p103 = por %p101, %p102
      %p104 = scmp.ne.s32.totalorder %s93, %s96
      %p105 = scmp.eq.s32.totalorder %s22, 1
      %p106 = por %p104, %p105
      %p107 = scmp.ne.s32.totalorder %s96, %s97
      %p108 = scmp.eq.s32.totalorder %s22, 0
      %p109 = por %p107, %p108
      %p110 = scmp.ne.s32.totalorder %s96, %s97
      %p111 = scmp.eq.s32.totalorder %s23, 1
      %p112 = por %p110, %p111
      %p114 = scmp.ne.s32.totalorder %s97, %s113
      %p115 = scmp.eq.s32.totalorder %s23, 0
      %p116 = por %p114, %p115
      %s117 = ssub.s32 %s24, %s36
      %p118 = scmp.eq.s32.totalorder %s117, 0
      %s120 = sadd.s32 %s119, 1
      %s121 = scalar_select %p118, %s119, %s120
      %p124 = pneg %p118
      %p125 = scmp.eq.s32.totalorder %s17, 1
      %p126 = por %p124, %p125
      %p127 = scmp.ne.s32.totalorder %s119, %s122
      %p128 = scmp.eq.s32.totalorder %s17, 0
      %p129 = por %p127, %p128
      %p130 = scmp.ne.s32.totalorder %s119, %s122
      %p131 = scmp.eq.s32.totalorder %s22, 1
      %p132 = por %p130, %p131
      %p133 = scmp.ne.s32.totalorder %s122, %s123
      %p134 = scmp.eq.s32.totalorder %s22, 0
      %p135 = por %p133, %p134
      %p136 = scmp.ne.s32.totalorder %s122, %s123
      %p137 = scmp.eq.s32.totalorder %s23, 1
      %p138 = por %p136, %p137
      %p140 = scmp.ne.s32.totalorder %s123, %s139
      %p141 = scmp.eq.s32.totalorder %s23, 0
      %p142 = por %p140, %p141
      %s143 = ssub.s32 %s24, %s36
      %s144 = ssub.s32 %s25, %s32
      %s145 = sor.u32 %s143, %s144
      %p146 = scmp.eq.s32.totalorder %s145, 0
      %s148 = sadd.s32 %s147, 1
      %s149 = scalar_select %p146, %s147, %s148
      %p152 = pneg %p146
      %p153 = scmp.eq.s32.totalorder %s17, 1
      %p154 = por %p152, %p153
      %p155 = scmp.ne.s32.totalorder %s147, %s150
      %p156 = scmp.eq.s32.totalorder %s17, 0
      %p157 = por %p155, %p156
      %p158 = scmp.ne.s32.totalorder %s147, %s150
      %p159 = scmp.eq.s32.totalorder %s22, 1
      %p160 = por %p158, %p159
      %p161 = scmp.ne.s32.totalorder %s150, %s151
      %p162 = scmp.eq.s32.totalorder %s22, 0
      %p163 = por %p161, %p162
      %p164 = scmp.ne.s32.totalorder %s150, %s151
      %p165 = scmp.eq.s32.totalorder %s23, 1
      %p166 = por %p164, %p165
      %p168 = scmp.ne.s32.totalorder %s151, %s167
      %p169 = scmp.eq.s32.totalorder %s23, 0
      %p170 = por %p168, %p169
      %s171 = ssub.s32 %s24, %s36
      %s172 = ssub.s32 %s25, %s32
      %s173 = sor.u32 %s171, %s172
      %p174 = scmp.eq.s32.totalorder %s173, 0
      %s176 = sadd.s32 %s175, 1
      %s177 = scalar_select %p174, %s175, %s176
      %p180 = pneg %p174
      %p181 = scmp.eq.s32.totalorder %s17, 1
      %p182 = por %p180, %p181
      %p183 = scmp.ne.s32.totalorder %s175, %s178
      %p184 = scmp.eq.s32.totalorder %s17, 0
      %p185 = por %p183, %p184
      %p186 = scmp.ne.s32.totalorder %s175, %s178
      %p187 = scmp.eq.s32.totalorder %s22, 1
      %p188 = por %p186, %p187
      %p189 = scmp.ne.s32.totalorder %s178, %s179
      %p190 = scmp.eq.s32.totalorder %s22, 0
      %p191 = por %p189, %p190
      %p192 = scmp.ne.s32.totalorder %s178, %s179
      %p193 = scmp.eq.s32.totalorder %s23, 1
      %p194 = por %p192, %p193
      %p196 = scmp.ne.s32.totalorder %s179, %s195
      %p197 = scmp.eq.s32.totalorder %s23, 0
      %p198 = por %p196, %p197
      %s199 = ssub.s32 %s24, %s36
      %p200 = scmp.eq.s32.totalorder %s199, 0
      %s202 = sadd.s32 %s201, 1
      %s203 = scalar_select %p200, %s201, %s202
      %p206 = pneg %p200
      %p207 = scmp.eq.s32.totalorder %s17, 1
      %p208 = por %p206, %p207
      %p209 = scmp.ne.s32.totalorder %s201, %s204
      %p210 = scmp.eq.s32.totalorder %s17, 0
      %p211 = por %p209, %p210
      %p212 = scmp.ne.s32.totalorder %s201, %s204
      %p213 = scmp.eq.s32.totalorder %s22, 1
      %p214 = por %p212, %p213
      %p215 = scmp.ne.s32.totalorder %s204, %s205
      %p216 = scmp.eq.s32.totalorder %s22, 0
      %p217 = por %p215, %p216
      %p218 = scmp.ne.s32.totalorder %s204, %s205
      %p219 = scmp.eq.s32.totalorder %s23, 1
      %p220 = por %p218, %p219
      %p222 = scmp.ne.s32.totalorder %s205, %s221
      %p223 = scmp.eq.s32.totalorder %s23, 0
      %p224 = por %p222, %p223
      %s225 = ssub.s32 %s24, %s36
      %s226 = ssub.s32 %s25, %s32
      %s227 = sor.u32 %s225, %s226
      %p228 = scmp.eq.s32.totalorder %s227, 0
      %s230 = sadd.s32 %s229, 1
      %s231 = scalar_select %p228, %s229, %s230
      %p234 = pneg %p228
      %p235 = scmp.eq.s32.totalorder %s17, 1
      %p236 = por %p234, %p235
      %p237 = scmp.ne.s32.totalorder %s229, %s232
      %p238 = scmp.eq.s32.totalorder %s17, 0
      %p239 = por %p237, %p238
      %p240 = scmp.ne.s32.totalorder %s229, %s232
      %p241 = scmp.eq.s32.totalorder %s22, 1
      %p242 = por %p240, %p241
      %p243 = scmp.ne.s32.totalorder %s232, %s233
      %p244 = scmp.eq.s32.totalorder %s22, 0
      %p245 = por %p243, %p244
      %p246 = scmp.ne.s32.totalorder %s232, %s233
      %p247 = scmp.eq.s32.totalorder %s23, 1
      %p248 = por %p246, %p247
      %p250 = scmp.ne.s32.totalorder %s233, %s249
      %p251 = scmp.eq.s32.totalorder %s23, 0
      %p252 = por %p250, %p251
      %s253 = ssub.s32 %s24, %s36
      %s254 = ssub.s32 %s25, %s32
      %s255 = sor.u32 %s253, %s254
      %p256 = scmp.eq.s32.totalorder %s255, 0
      %s258 = sadd.s32 %s257, 1
      %s259 = scalar_select %p256, %s257, %s258
      %p262 = pneg %p256
      %p263 = scmp.eq.s32.totalorder %s17, 1
      %p264 = por %p262, %p263
      %p265 = scmp.ne.s32.totalorder %s257, %s260
      %p266 = scmp.eq.s32.totalorder %s17, 0
      %p267 = por %p265, %p266
      %p268 = scmp.ne.s32.totalorder %s257, %s260
      %p269 = scmp.eq.s32.totalorder %s22, 1
      %p270 = por %p268, %p269
      %p271 = scmp.ne.s32.totalorder %s260, %s261
      %p272 = scmp.eq.s32.totalorder %s22, 0
      %p273 = por %p271, %p272
      %p274 = scmp.ne.s32.totalorder %s260, %s261
      %p275 = scmp.eq.s32.totalorder %s23, 1
      %p276 = por %p274, %p275
      %p278 = scmp.ne.s32.totalorder %s261, %s277
      %p279 = scmp.eq.s32.totalorder %s23, 0
      %p280 = por %p278, %p279
      %p281 = scmp.le.s32.totalorder 1, %s17
      %p282 = scmp.lt.s32.totalorder %s17, 3
      %p283 = pnand %p281, %p282
      %p284 = pneg %p283
      // Predicated region
      $region9: #{tpu_custom_call.1} parent=5 // pred_check
        _
      $region10: #{tpu_custom_call.1} parent=5 // pred_check_branch
        %286 = sbr.rel (%p283) target = $region12
      $region11: #{tpu_custom_call.1} parent=5 // pred_region
        %s287 = ssub.s32 %s17, 1
      $region12: #{tpu_custom_call.1} parent=5 // pred_fallthru
        _
      %p288 = scmp.lt.s32.totalorder %s17, 2
      // Predicated region
      $region13: #{tpu_custom_call.1} parent=5 // pred_check
        %p289 = pneg %p288
      $region14: #{tpu_custom_call.1} parent=5 // pred_check_branch
        %291 = sbr.rel (%p289) target = $region16
      $region15: #{tpu_custom_call.1} parent=5 // pred_region
        // Predicated region
        $region17: #{tpu_custom_call.1} parent=15 // pred_check
          %p292 = pneg %p51
        $region18: #{tpu_custom_call.1} parent=15 // pred_check_branch
          %294 = sbr.rel (%p292) target = $region20
        $region19: #{tpu_custom_call.1} parent=15 // pred_region
          %p295 = scmp.lt.s32.totalorder %s24, 1
          %s296 = scalar_select %p295, %s24, 1
          %p297 = scmp.lt.s32.totalorder %s25, 0
          %s298 = scalar_select %p297, %s25, 0
          %s299 = smul.addr %s296, 4
          %s300 = sadd.s32 %s298, %s299
          %s301 = smul.addr %s300, 8
          %s302 = scalar_lea.vmem %s0, %s301
        $region20: #{tpu_custom_call.1} parent=15 // pred_fallthru
          _
        // Predicated region
        $region21: #{tpu_custom_call.1} parent=15 // pred_check
          %p303 = pneg %p77
        $region22: #{tpu_custom_call.1} parent=15 // pred_check_branch
          %305 = sbr.rel (%p303) target = $region24
        $region23: #{tpu_custom_call.1} parent=15 // pred_region
          %p306 = scmp.lt.s32.totalorder %s24, 1
          %s307 = scalar_select %p306, %s24, 1
          %s308 = smul.addr %s307, 4
          %s309 = smul.addr %s308, 8
          %s310 = scalar_lea.vmem %s1, %s309
        $region24: #{tpu_custom_call.1} parent=15 // pred_fallthru
          _
        // Predicated region
        $region25: #{tpu_custom_call.1} parent=15 // pred_check
          %p311 = pneg %p103
        $region26: #{tpu_custom_call.1} parent=15 // pred_check_branch
          %313 = sbr.rel (%p311) target = $region28
        $region27: #{tpu_custom_call.1} parent=15 // pred_region
          %p314 = scmp.lt.s32.totalorder %s24, 1
          %s315 = scalar_select %p314, %s24, 1
          %s316 = smul.addr %s315, 4
          %s317 = smul.addr %s316, 8
          %s318 = scalar_lea.vmem %s2, %s317
        $region28: #{tpu_custom_call.1} parent=15 // pred_fallthru
          _
        // Predicated region
        $region29: #{tpu_custom_call.1} parent=15 // pred_check
          %p319 = pneg %p129
        $region30: #{tpu_custom_call.1} parent=15 // pred_check_branch
          %321 = sbr.rel (%p319) target = $region32
        $region31: #{tpu_custom_call.1} parent=15 // pred_region
          %p322 = scmp.lt.s32.totalorder %s24, 1
          %s323 = scalar_select %p322, %s24, 1
          %s324 = smul.addr %s323, 4
          %s325 = smul.addr %s324, 8
          %s326 = scalar_lea.vmem %s3, %s325
        $region32: #{tpu_custom_call.1} parent=15 // pred_fallthru
          _
        // Predicated region
        $region33: #{tpu_custom_call.1} parent=15 // pred_check
          %p327 = pneg %p157
        $region34: #{tpu_custom_call.1} parent=15 // pred_check_branch
          %329 = sbr.rel (%p327) target = $region36
        $region35: #{tpu_custom_call.1} parent=15 // pred_region
          %p330 = scmp.lt.s32.totalorder %s24, 1
          %s331 = scalar_select %p330, %s24, 1
          %p332 = scmp.lt.s32.totalorder %s25, 0
          %s333 = scalar_select %p332, %s25, 0
          %s334 = smul.addr %s331, 4
          %s335 = sadd.s32 %s333, %s334
          %s336 = smul.addr %s335, 8
          %s337 = scalar_lea.vmem %s4, %s336
        $region36: #{tpu_custom_call.1} parent=15 // pred_fallthru
          _
        // Predicated region
        $region37: #{tpu_custom_call.1} parent=15 // pred_check
          %p338 = pneg %p185
        $region38: #{tpu_custom_call.1} parent=15 // pred_check_branch
          %340 = sbr.rel (%p338) target = $region40
        $region39: #{tpu_custom_call.1} parent=15 // pred_region
          %p341 = scmp.lt.s32.totalorder %s24, 1
          %s342 = scalar_select %p341, %s24, 1
          %p343 = scmp.lt.s32.totalorder %s25, 0
          %s344 = scalar_select %p343, %s25, 0
          %s345 = smul.addr %s342, 4
          %s346 = sadd.s32 %s344, %s345
          %s347 = smul.addr %s346, 8
          %s348 = scalar_lea.vmem %s5, %s347
        $region40: #{tpu_custom_call.1} parent=15 // pred_fallthru
          _
        // Predicated region
        $region41: #{tpu_custom_call.1} parent=15 // pred_check
          %p349 = pneg %p211
        $region42: #{tpu_custom_call.1} parent=15 // pred_check_branch
          %351 = sbr.rel (%p349) target = $region44
        $region43: #{tpu_custom_call.1} parent=15 // pred_region
          %p352 = scmp.lt.s32.totalorder %s24, 1
          %s353 = scalar_select %p352, %s24, 1
          %s354 = smul.addr %s353, 4
          %s355 = scalar_lea.vmem %s6, %s354
        $region44: #{tpu_custom_call.1} parent=15 // pred_fallthru
          _
        // Predicated region
        $region45: #{tpu_custom_call.1} parent=15 // pred_check
          %p356 = pneg %p239
        $region46: #{tpu_custom_call.1} parent=15 // pred_check_branch
          %358 = sbr.rel (%p356) target = $region48
        $region47: #{tpu_custom_call.1} parent=15 // pred_region
          %s359 = smul.u32 8, %s25
          %p360 = scmp.lt.s32.totalorder %s24, 1
          %s361 = scalar_select %p360, %s24, 1
          %p362 = scmp.lt.s32.totalorder %s359, 7
          %s363 = scalar_select %p362, %s359, 7
          %s364 = smul.addr %s361, 8
          %s365 = sadd.s32 %s363, %s364
          %s366 = smul.addr %s365, 8
          %s367 = scalar_lea.vmem %s7, %s366
          %s368 = smul.u32 8, %s25
        $region48: #{tpu_custom_call.1} parent=15 // pred_fallthru
          _
      $region16: #{tpu_custom_call.1} parent=5 // pred_fallthru
        _
      %p369 = scmp.le.s32.totalorder 1, %s17
      %p370 = scmp.lt.s32.totalorder %s17, 3
      %p371 = pnand %p369, %p370
      %p372 = pneg %p371
      // Predicated region
      $region49: #{tpu_custom_call.1} parent=5 // pred_check
        _
      $region50: #{tpu_custom_call.1} parent=5 // pred_check_branch
        %374 = sbr.rel (%p371) target = $region52
      $region51: #{tpu_custom_call.1} parent=5 // pred_region
        %s375 = ssub.s32 %s17, 1
        %p376 = scmp.lt.s32.totalorder %s26, 1
        %s377 = scalar_select %p376, %s26, 1
        %p378 = scmp.lt.s32.totalorder %s27, 0
        %s379 = scalar_select %p378, %s27, 0
        %s380 = smul.addr %s377, 4
        %s381 = sadd.s32 %s379, %s380
        %s382 = smul.addr %s381, 8
        %s383 = scalar_lea.vmem %s0, %s382
        %p384 = pneg %p57
        %p385 = pneg %p54
        %p386 = scmp.lt.s32.totalorder %s26, 1
        %s387 = scalar_select %p386, %s26, 1
        %s388 = smul.addr %s387, 4
        %s389 = smul.addr %s388, 8
        %s390 = scalar_lea.vmem %s1, %s389
        %p391 = pneg %p83
        %p392 = pneg %p80
        %p393 = scmp.lt.s32.totalorder %s26, 1
        %s394 = scalar_select %p393, %s26, 1
        %s395 = smul.addr %s394, 4
        %s396 = smul.addr %s395, 8
        %s397 = scalar_lea.vmem %s2, %s396
        %p398 = pneg %p109
        %p399 = pneg %p106
        %p400 = scmp.lt.s32.totalorder %s26, 1
        %s401 = scalar_select %p400, %s26, 1
        %s402 = smul.addr %s401, 4
        %s403 = smul.addr %s402, 8
        %s404 = scalar_lea.vmem %s3, %s403
        %p405 = pneg %p135
        %p406 = pneg %p132
        %p407 = scmp.lt.s32.totalorder %s26, 1
        %s408 = scalar_select %p407, %s26, 1
        %p409 = scmp.lt.s32.totalorder %s27, 0
        %s410 = scalar_select %p409, %s27, 0
        %s411 = smul.addr %s408, 4
        %s412 = sadd.s32 %s410, %s411
        %s413 = smul.addr %s412, 8
        %s414 = scalar_lea.vmem %s4, %s413
        %p415 = pneg %p163
        %p416 = pneg %p160
        %p417 = scmp.lt.s32.totalorder %s26, 1
        %s418 = scalar_select %p417, %s26, 1
        %p419 = scmp.lt.s32.totalorder %s27, 0
        %s420 = scalar_select %p419, %s27, 0
        %s421 = smul.addr %s418, 4
        %s422 = sadd.s32 %s420, %s421
        %s423 = smul.addr %s422, 8
        %s424 = scalar_lea.vmem %s5, %s423
        %p425 = pneg %p191
        %p426 = pneg %p188
        %p427 = scmp.lt.s32.totalorder %s26, 1
        %s428 = scalar_select %p427, %s26, 1
        %s429 = smul.addr %s428, 4
        %s430 = scalar_lea.vmem %s6, %s429
        %p431 = pneg %p217
        %p432 = pneg %p214
        %s433 = smul.u32 8, %s27
        %p434 = scmp.lt.s32.totalorder %s26, 1
        %s435 = scalar_select %p434, %s26, 1
        %p436 = scmp.lt.s32.totalorder %s433, 7
        %s437 = scalar_select %p436, %s433, 7
        %s438 = smul.addr %s435, 8
        %s439 = sadd.s32 %s437, %s438
        %s440 = smul.addr %s439, 8
        %s441 = scalar_lea.vmem %s7, %s440
        %p442 = pneg %p245
        %p443 = pneg %p242
        %p444 = pneg %p273
        %p445 = pneg %p270
        %s446 = sand.u32 %s260, 1
        %s447 = scalar_lea.sflag [#allocation4], %s446
        %s448 = sand.u32 %s260, 1
        %s449 = smul.addr %s448, 32
        %s450 = scalar_lea.vmem [#allocation3], %s449
        %p451 = scmp.lt.s32.totalorder %s26, 1
        %s452 = scalar_select %p451, %s26, 1
        %p453 = scmp.lt.s32.totalorder %s27, 0
        %s454 = scalar_select %p453, %s27, 0
        %s455 = smul.addr %s452, 4
        %s456 = sadd.s32 %s454, %s455
        %s457 = smul.addr %s456, 8
        %s458 = scalar_lea.vmem %s0, %s457
        %p459 = scmp.lt.s32.totalorder %s26, 1
        %s460 = scalar_select %p459, %s26, 1
        %s461 = smul.addr %s460, 4
        %s462 = smul.addr %s461, 8
        %s463 = scalar_lea.vmem %s1, %s462
        %p464 = scmp.lt.s32.totalorder %s26, 1
        %s465 = scalar_select %p464, %s26, 1
        %s466 = smul.addr %s465, 4
        %s467 = smul.addr %s466, 8
        %s468 = scalar_lea.vmem %s2, %s467
        %p469 = scmp.lt.s32.totalorder %s26, 1
        %s470 = scalar_select %p469, %s26, 1
        %s471 = smul.addr %s470, 4
        %s472 = smul.addr %s471, 8
        %s473 = scalar_lea.vmem %s3, %s472
        %p474 = scmp.lt.s32.totalorder %s26, 1
        %s475 = scalar_select %p474, %s26, 1
        %p476 = scmp.lt.s32.totalorder %s27, 0
        %s477 = scalar_select %p476, %s27, 0
        %s478 = smul.addr %s475, 4
        %s479 = sadd.s32 %s477, %s478
        %s480 = smul.addr %s479, 8
        %s481 = scalar_lea.vmem %s4, %s480
        %p482 = scmp.lt.s32.totalorder %s26, 1
        %s483 = scalar_select %p482, %s26, 1
        %p484 = scmp.lt.s32.totalorder %s27, 0
        %s485 = scalar_select %p484, %s27, 0
        %s486 = smul.addr %s483, 4
        %s487 = sadd.s32 %s485, %s486
        %s488 = smul.addr %s487, 8
        %s489 = scalar_lea.vmem %s5, %s488
        %p490 = scmp.lt.s32.totalorder %s26, 1
        %s491 = scalar_select %p490, %s26, 1
        %s492 = smul.addr %s491, 4
        %s493 = scalar_lea.vmem %s6, %s492
        %s494 = smul.u32 8, %s27
        %p495 = scmp.lt.s32.totalorder %s26, 1
        %s496 = scalar_select %p495, %s26, 1
        %p497 = scmp.lt.s32.totalorder %s494, 7
        %s498 = scalar_select %p497, %s494, 7
        %s499 = smul.addr %s496, 8
        %s500 = sadd.s32 %s498, %s499
        %s501 = smul.addr %s500, 8
        %s502 = scalar_lea.vmem %s7, %s501
        %s503 = smul.u32 8, %s27
        %v504 = vld [vmem:[%s458] sm:$0xff]
        %v505 = vld [vmem:[%s463] sm:$0xff]
        %v506 = vld [vmem:[%s481] sm:$0xff]
        %vm507 = vcmask 162816
        %v509 = vsel %vm507, %v504, 0
        %v512 = vsel %vm507, %v505, 0
        %514 = vmatprep.subr.mxu0 0.0
        %515 = vmatpush1.xpose.msra.mxu0 %v512
        %516 = vmatprep.subr.mxu0 0.0
        %517 = vmatpush1.xpose.msra.mxu0 0.0
        %518 = vmatprep.subr.mxu0 0.0
        %519 = vmatpush1.xpose.msra.mxu0 0.0
        %520 = vmatprep.subr.mxu0 0.0
        %521 = vmatpush1.xpose.msra.mxu0 0.0
        %522 = vmatprep.subr.mxu0 0.0
        %523 = vmatpush1.xpose.msra.mxu0 0.0
        %524 = vmatprep.subr.mxu0 0.0
        %525 = vmatpush1.xpose.msra.mxu0 0.0
        %526 = vmatprep.subr.mxu0 0.0
        %527 = vmatpush1.xpose.msra.mxu0 0.0
        %528 = vmatprep.subr.mxu0 0.0
        %529 = vmatpush1.xpose.msra.mxu0 0.0
        %530 = vmatprep.subr.mxu0 0.0
        %531 = vmatpush1.xpose.msra.mxu0 0.0
        %532 = vmatprep.subr.mxu0 0.0
        %533 = vmatpush1.xpose.msra.mxu0 0.0
        %534 = vmatprep.subr.mxu0 0.0
        %535 = vmatpush1.xpose.msra.mxu0 0.0
        %536 = vmatprep.subr.mxu0 0.0
        %537 = vmatpush1.xpose.msra.mxu0 0.0
        %538 = vmatprep.subr.mxu0 0.0
        %539 = vmatpush1.xpose.msra.mxu0 0.0
        %540 = vmatprep.subr.mxu0 0.0
        %541 = vmatpush1.xpose.msra.mxu0 0.0
        %542 = vmatprep.subr.mxu0 0.0
        %543 = vmatpush1.xpose.msra.mxu0 0.0
        %544 = vmatprep.subr.mxu0 0.0
        %545 = vmatpush1.xpose.msra.mxu0 0.0
        %546 = vmatprep.subr.mxu0 0.0
        %547 = vmatpush1.xpose.msra.mxu0 0.0
        %548 = vmatprep.subr.mxu0 0.0
        %549 = vmatpush1.xpose.msra.mxu0 0.0
        %550 = vmatprep.subr.mxu0 0.0
        %551 = vmatpush1.xpose.msra.mxu0 0.0
        %552 = vmatprep.subr.mxu0 0.0
        %553 = vmatpush1.xpose.msra.mxu0 0.0
        %554 = vmatprep.subr.mxu0 0.0
        %555 = vmatpush1.xpose.msra.mxu0 0.0
        %556 = vmatprep.subr.mxu0 0.0
        %557 = vmatpush1.xpose.msra.mxu0 0.0
        %558 = vmatprep.subr.mxu0 0.0
        %559 = vmatpush1.xpose.msra.mxu0 0.0
        %560 = vmatprep.subr.mxu0 0.0
        %561 = vmatpush1.xpose.msra.mxu0 0.0
        %562 = vmatprep.subr.mxu0 0.0
        %563 = vmatpush1.xpose.msra.mxu0 0.0
        %564 = vmatprep.subr.mxu0 0.0
        %565 = vmatpush1.xpose.msra.mxu0 0.0
        %566 = vmatprep.subr.mxu0 0.0
        %567 = vmatpush1.xpose.msra.mxu0 0.0
        %568 = vmatprep.subr.mxu0 0.0
        %569 = vmatpush1.xpose.msra.mxu0 0.0
        %570 = vmatprep.subr.mxu0 0.0
        %571 = vmatpush1.xpose.msra.mxu0 0.0
        %572 = vmatprep.subr.mxu0 0.0
        %573 = vmatpush1.xpose.msra.mxu0 0.0
        %574 = vmatprep.subr.mxu0 0.0
        %575 = vmatpush1.xpose.msra.mxu0 0.0
        %576 = vmatprep.subr.mxu0 0.0
        %577 = vmatpush1.xpose.msra.mxu0 0.0
        %578 = vmatprep.mubr.f32.mxu0 0.0
        %579 = vmatmul.mubr.f32.gmra.mrb[0].mxu0 %v509
        %v580 = vpop.f32.mrb[0].mxu0
        %v581 = vadd.f32 %v506, %v580
        %v582 = vpop.f32.mrb[0].mxu0
        %583 = vdwg.mxu0
        %v584 = vld [vmem:[%s489] sm:$0xff]
        %586 = vset.pattern.permute.xlu0 0
        %587 = vperm.xlu0 %586, %v584
        %v588 = vpop.permute.xlu0 %587
        %v590 = vadd.f32 %v581, %v588
        %v591 = vld [vmem:[%s493] sm:$0x1]
        %v593 = vlaneseq
        %v594 = vshrl.u32 %v593, 7
        %v595 = vsub.s32 0, %v594
        %v596 = vrot.slane %v591, %v595
        %v598 = vadd.f32 %v590, %v596
        %vm599 = vcmask 64512
        %v600 = vsel %vm599, %v598, -inf
        %601 = vmax.xlane.f32.xlu0 %v600
        %v602 = vpop.xlane.xlu0 %601
        %v603 = vsub.f32 %v598, %v602
        %v604 = vmul.f32 %v603, 1.442695
        %v605 = vpow.pop %v604
        %v606 = vsel %vm599, %v605, 0.0
        %607 = vadd.xlane.f32.xlu0 %v606
        %v608 = vpop.xlane.xlu0 %607
        %v609 = vrcp.pop %v608
        %v610 = vmul.f32 %v605, %v609
        %611 = vst.msk [vmem:[#allocation2] sm:$0xff] %vm599, %v610
        %v612 = vld [vmem:[%s468] sm:$0xff]
        %v614 = vsel %vm599, %v610, 0
        %616 = vmatprep.subr.mxu0 0.0
        %617 = vmatpush1.msra.mxu0 %v612
        %618 = vmatprep.subr.mxu0 0.0
        %619 = vmatpush1.msra.mxu0 0.0
        %620 = vmatprep.subr.mxu0 0.0
        %621 = vmatpush1.msra.mxu0 0.0
        %622 = vmatprep.subr.mxu0 0.0
        %623 = vmatpush1.msra.mxu0 0.0
        %624 = vmatprep.subr.mxu0 0.0
        %625 = vmatpush1.msra.mxu0 0.0
        %626 = vmatprep.subr.mxu0 0.0
        %627 = vmatpush1.msra.mxu0 0.0
        %628 = vmatprep.subr.mxu0 0.0
        %629 = vmatpush1.msra.mxu0 0.0
        %630 = vmatprep.subr.mxu0 0.0
        %631 = vmatpush1.msra.mxu0 0.0
        %632 = vmatprep.subr.mxu0 0.0
        %633 = vmatpush1.msra.mxu0 0.0
        %634 = vmatprep.subr.mxu0 0.0
        %635 = vmatpush1.msra.mxu0 0.0
        %636 = vmatprep.subr.mxu0 0.0
        %637 = vmatpush1.msra.mxu0 0.0
        %638 = vmatprep.subr.mxu0 0.0
        %639 = vmatpush1.msra.mxu0 0.0
        %640 = vmatprep.subr.mxu0 0.0
        %641 = vmatpush1.msra.mxu0 0.0
        %642 = vmatprep.subr.mxu0 0.0
        %643 = vmatpush1.msra.mxu0 0.0
        %644 = vmatprep.subr.mxu0 0.0
        %645 = vmatpush1.msra.mxu0 0.0
        %646 = vmatprep.subr.mxu0 0.0
        %647 = vmatpush1.msra.mxu0 0.0
        %648 = vmatprep.subr.mxu0 0.0
        %649 = vmatpush1.msra.mxu0 0.0
        %650 = vmatprep.subr.mxu0 0.0
        %651 = vmatpush1.msra.mxu0 0.0
        %652 = vmatprep.subr.mxu0 0.0
        %653 = vmatpush1.msra.mxu0 0.0
        %654 = vmatprep.subr.mxu0 0.0
        %655 = vmatpush1.msra.mxu0 0.0
        %656 = vmatprep.subr.mxu0 0.0
        %657 = vmatpush1.msra.mxu0 0.0
        %658 = vmatprep.subr.mxu0 0.0
        %659 = vmatpush1.msra.mxu0 0.0
        %660 = vmatprep.subr.mxu0 0.0
        %661 = vmatpush1.msra.mxu0 0.0
        %662 = vmatprep.subr.mxu0 0.0
        %663 = vmatpush1.msra.mxu0 0.0
        %664 = vmatprep.subr.mxu0 0.0
        %665 = vmatpush1.msra.mxu0 0.0
        %666 = vmatprep.subr.mxu0 0.0
        %667 = vmatpush1.msra.mxu0 0.0
        %668 = vmatprep.subr.mxu0 0.0
        %669 = vmatpush1.msra.mxu0 0.0
        %670 = vmatprep.subr.mxu0 0.0
        %671 = vmatpush1.msra.mxu0 0.0
        %672 = vmatprep.subr.mxu0 0.0
        %673 = vmatpush1.msra.mxu0 0.0
        %674 = vmatprep.subr.mxu0 0.0
        %675 = vmatpush1.msra.mxu0 0.0
        %676 = vmatprep.subr.mxu0 0.0
        %677 = vmatpush1.msra.mxu0 0.0
        %678 = vmatprep.subr.mxu0 0.0
        %679 = vmatpush1.msra.mxu0 0.0
        %680 = vmatprep.mubr.f32.mxu0 0.0
        %681 = vmatmul.mubr.f32.gmra.mrb[0].mxu0 %v614
        %v682 = vpop.f32.mrb[0].mxu0
        %v683 = vadd.f32 0.0, %v682
        %v684 = vpop.f32.mrb[0].mxu0
        %685 = vdwg.mxu0
        %v686 = vld [vmem:[%s473] sm:$0xff]
        %687 = vmatprep.subr.mxu0 0.0
        %688 = vmatpush1.msra.mxu0 %v686
        %689 = vmatprep.subr.mxu0 0.0
        %690 = vmatpush1.msra.mxu0 0.0
        %691 = vmatprep.subr.mxu0 0.0
        %692 = vmatpush1.msra.mxu0 0.0
        %693 = vmatprep.subr.mxu0 0.0
        %694 = vmatpush1.msra.mxu0 0.0
        %695 = vmatprep.subr.mxu0 0.0
        %696 = vmatpush1.msra.mxu0 0.0
        %697 = vmatprep.subr.mxu0 0.0
        %698 = vmatpush1.msra.mxu0 0.0
        %699 = vmatprep.subr.mxu0 0.0
        %700 = vmatpush1.msra.mxu0 0.0
        %701 = vmatprep.subr.mxu0 0.0
        %702 = vmatpush1.msra.mxu0 0.0
        %703 = vmatprep.subr.mxu0 0.0
        %704 = vmatpush1.msra.mxu0 0.0
        %705 = vmatprep.subr.mxu0 0.0
        %706 = vmatpush1.msra.mxu0 0.0
        %707 = vmatprep.subr.mxu0 0.0
        %708 = vmatpush1.msra.mxu0 0.0
        %709 = vmatprep.subr.mxu0 0.0
        %710 = vmatpush1.msra.mxu0 0.0
        %711 = vmatprep.subr.mxu0 0.0
        %712 = vmatpush1.msra.mxu0 0.0
        %713 = vmatprep.subr.mxu0 0.0
        %714 = vmatpush1.msra.mxu0 0.0
        %715 = vmatprep.subr.mxu0 0.0
        %716 = vmatpush1.msra.mxu0 0.0
        %717 = vmatprep.subr.mxu0 0.0
        %718 = vmatpush1.msra.mxu0 0.0
        %719 = vmatprep.subr.mxu0 0.0
        %720 = vmatpush1.msra.mxu0 0.0
        %721 = vmatprep.subr.mxu0 0.0
        %722 = vmatpush1.msra.mxu0 0.0
        %723 = vmatprep.subr.mxu0 0.0
        %724 = vmatpush1.msra.mxu0 0.0
        %725 = vmatprep.subr.mxu0 0.0
        %726 = vmatpush1.msra.mxu0 0.0
        %727 = vmatprep.subr.mxu0 0.0
        %728 = vmatpush1.msra.mxu0 0.0
        %729 = vmatprep.subr.mxu0 0.0
        %730 = vmatpush1.msra.mxu0 0.0
        %731 = vmatprep.subr.mxu0 0.0
        %732 = vmatpush1.msra.mxu0 0.0
        %733 = vmatprep.subr.mxu0 0.0
        %734 = vmatpush1.msra.mxu0 0.0
        %735 = vmatprep.subr.mxu0 0.0
        %736 = vmatpush1.msra.mxu0 0.0
        %737 = vmatprep.subr.mxu0 0.0
        %738 = vmatpush1.msra.mxu0 0.0
        %739 = vmatprep.subr.mxu0 0.0
        %740 = vmatpush1.msra.mxu0 0.0
        %741 = vmatprep.subr.mxu0 0.0
        %742 = vmatpush1.msra.mxu0 0.0
        %743 = vmatprep.subr.mxu0 0.0
        %744 = vmatpush1.msra.mxu0 0.0
        %745 = vmatprep.subr.mxu0 0.0
        %746 = vmatpush1.msra.mxu0 0.0
        %747 = vmatprep.subr.mxu0 0.0
        %748 = vmatpush1.msra.mxu0 0.0
        %749 = vmatprep.subr.mxu0 0.0
        %750 = vmatpush1.msra.mxu0 0.0
        %751 = vmatprep.mubr.f32.mxu0 0.0
        %752 = vmatmul.mubr.f32.gmra.mrb[0].mxu0 %v614
        %v753 = vpop.f32.mrb[0].mxu0
        %v754 = vadd.f32 0.0, %v753
        %v755 = vpop.f32.mrb[0].mxu0
        %756 = vdwg.mxu0
        %758 = vrot.lane.b32.xlu0 %v683, 4
        %v759 = vpop.permute.xlu0 %758
        %vm761 = vcmask 97312
        %762 = vst.msk [vmem:[%s450] sm:$0xff] %vm761, %v759
        %764 = vrot.lane.b32.xlu0 %v754, 12
        %v765 = vpop.permute.xlu0 %764
        %vm767 = vcmask 146528
        %768 = vst.msk [vmem:[%s450] sm:$0xff] %vm767, %v765
        %s769 = scalar_lea.vmem %s458, 8
        %v770 = vld [vmem:[%s769] sm:$0xff]
        %s771 = scalar_lea.vmem %s463, 8
        %v772 = vld [vmem:[%s771] sm:$0xff]
        %s773 = scalar_lea.vmem %s481, 8
        %v774 = vld [vmem:[%s773] sm:$0xff]
        %v776 = vsel %vm507, %v770, 0
        %v779 = vsel %vm507, %v772, 0
        %781 = vmatprep.subr.mxu0 0.0
        %782 = vmatpush1.xpose.msra.mxu0 %v779
        %783 = vmatprep.subr.mxu0 0.0
        %784 = vmatpush1.xpose.msra.mxu0 0.0
        %785 = vmatprep.subr.mxu0 0.0
        %786 = vmatpush1.xpose.msra.mxu0 0.0
        %787 = vmatprep.subr.mxu0 0.0
        %788 = vmatpush1.xpose.msra.mxu0 0.0
        %789 = vmatprep.subr.mxu0 0.0
        %790 = vmatpush1.xpose.msra.mxu0 0.0
        %791 = vmatprep.subr.mxu0 0.0
        %792 = vmatpush1.xpose.msra.mxu0 0.0
        %793 = vmatprep.subr.mxu0 0.0
        %794 = vmatpush1.xpose.msra.mxu0 0.0
        %795 = vmatprep.subr.mxu0 0.0
        %796 = vmatpush1.xpose.msra.mxu0 0.0
        %797 = vmatprep.subr.mxu0 0.0
        %798 = vmatpush1.xpose.msra.mxu0 0.0
        %799 = vmatprep.subr.mxu0 0.0
        %800 = vmatpush1.xpose.msra.mxu0 0.0
        %801 = vmatprep.subr.mxu0 0.0
        %802 = vmatpush1.xpose.msra.mxu0 0.0
        %803 = vmatprep.subr.mxu0 0.0
        %804 = vmatpush1.xpose.msra.mxu0 0.0
        %805 = vmatprep.subr.mxu0 0.0
        %806 = vmatpush1.xpose.msra.mxu0 0.0
        %807 = vmatprep.subr.mxu0 0.0
        %808 = vmatpush1.xpose.msra.mxu0 0.0
        %809 = vmatprep.subr.mxu0 0.0
        %810 = vmatpush1.xpose.msra.mxu0 0.0
        %811 = vmatprep.subr.mxu0 0.0
        %812 = vmatpush1.xpose.msra.mxu0 0.0
        %813 = vmatprep.subr.mxu0 0.0
        %814 = vmatpush1.xpose.msra.mxu0 0.0
        %815 = vmatprep.subr.mxu0 0.0
        %816 = vmatpush1.xpose.msra.mxu0 0.0
        %817 = vmatprep.subr.mxu0 0.0
        %818 = vmatpush1.xpose.msra.mxu0 0.0
        %819 = vmatprep.subr.mxu0 0.0
        %820 = vmatpush1.xpose.msra.mxu0 0.0
        %821 = vmatprep.subr.mxu0 0.0
        %822 = vmatpush1.xpose.msra.mxu0 0.0
        %823 = vmatprep.subr.mxu0 0.0
        %824 = vmatpush1.xpose.msra.mxu0 0.0
        %825 = vmatprep.subr.mxu0 0.0
        %826 = vmatpush1.xpose.msra.mxu0 0.0
        %827 = vmatprep.subr.mxu0 0.0
        %828 = vmatpush1.xpose.msra.mxu0 0.0
        %829 = vmatprep.subr.mxu0 0.0
        %830 = vmatpush1.xpose.msra.mxu0 0.0
        %831 = vmatprep.subr.mxu0 0.0
        %832 = vmatpush1.xpose.msra.mxu0 0.0
        %833 = vmatprep.subr.mxu0 0.0
        %834 = vmatpush1.xpose.msra.mxu0 0.0
        %835 = vmatprep.subr.mxu0 0.0
        %836 = vmatpush1.xpose.msra.mxu0 0.0
        %837 = vmatprep.subr.mxu0 0.0
        %838 = vmatpush1.xpose.msra.mxu0 0.0
        %839 = vmatprep.subr.mxu0 0.0
        %840 = vmatpush1.xpose.msra.mxu0 0.0
        %841 = vmatprep.subr.mxu0 0.0
        %842 = vmatpush1.xpose.msra.mxu0 0.0
        %843 = vmatprep.subr.mxu0 0.0
        %844 = vmatpush1.xpose.msra.mxu0 0.0
        %845 = vmatprep.mubr.f32.mxu0 0.0
        %846 = vmatmul.mubr.f32.gmra.mrb[0].mxu0 %v776
        %v847 = vpop.f32.mrb[0].mxu0
        %v848 = vadd.f32 %v774, %v847
        %v849 = vpop.f32.mrb[0].mxu0
        %850 = vdwg.mxu0
        %s851 = scalar_lea.vmem %s489, 8
        %v852 = vld [vmem:[%s851] sm:$0xff]
        %854 = vset.pattern.permute.xlu0 0
        %855 = vperm.xlu0 %854, %v852
        %v856 = vpop.permute.xlu0 %855
        %v858 = vadd.f32 %v848, %v856
        %s859 = scalar_lea.vmem %s493, 1
        %v860 = vld [vmem:[%s859] sm:$0x1]
        %v862 = vlaneseq
        %v863 = vshrl.u32 %v862, 7
        %v864 = vsub.s32 0, %v863
        %v865 = vrot.slane %v860, %v864
        %v867 = vadd.f32 %v858, %v865
        %v868 = vsel %vm599, %v867, -inf
        %869 = vmax.xlane.f32.xlu0 %v868
        %v870 = vpop.xlane.xlu0 %869
        %v871 = vsub.f32 %v867, %v870
        %v872 = vmul.f32 %v871, 1.442695
        %v873 = vpow.pop %v872
        %v874 = vsel %vm599, %v873, 0.0
        %875 = vadd.xlane.f32.xlu0 %v874
        %v876 = vpop.xlane.xlu0 %875
        %v877 = vrcp.pop %v876
        %v878 = vmul.f32 %v873, %v877
        %s879 = scalar_lea.vmem [#allocation2], 8
        %880 = vst.msk [vmem:[%s879] sm:$0xff] %vm599, %v878
        %s881 = scalar_lea.vmem %s468, 8
        %v882 = vld [vmem:[%s881] sm:$0xff]
        %v884 = vsel %vm599, %v878, 0
        %886 = vmatprep.subr.mxu0 0.0
        %887 = vmatpush1.msra.mxu0 %v882
        %888 = vmatprep.subr.mxu0 0.0
        %889 = vmatpush1.msra.mxu0 0.0
        %890 = vmatprep.subr.mxu0 0.0
        %891 = vmatpush1.msra.mxu0 0.0
        %892 = vmatprep.subr.mxu0 0.0
        %893 = vmatpush1.msra.mxu0 0.0
        %894 = vmatprep.subr.mxu0 0.0
        %895 = vmatpush1.msra.mxu0 0.0
        %896 = vmatprep.subr.mxu0 0.0
        %897 = vmatpush1.msra.mxu0 0.0
        %898 = vmatprep.subr.mxu0 0.0
        %899 = vmatpush1.msra.mxu0 0.0
        %900 = vmatprep.subr.mxu0 0.0
        %901 = vmatpush1.msra.mxu0 0.0
        %902 = vmatprep.subr.mxu0 0.0
        %903 = vmatpush1.msra.mxu0 0.0
        %904 = vmatprep.subr.mxu0 0.0
        %905 = vmatpush1.msra.mxu0 0.0
        %906 = vmatprep.subr.mxu0 0.0
        %907 = vmatpush1.msra.mxu0 0.0
        %908 = vmatprep.subr.mxu0 0.0
        %909 = vmatpush1.msra.mxu0 0.0
        %910 = vmatprep.subr.mxu0 0.0
        %911 = vmatpush1.msra.mxu0 0.0
        %912 = vmatprep.subr.mxu0 0.0
        %913 = vmatpush1.msra.mxu0 0.0
        %914 = vmatprep.subr.mxu0 0.0
        %915 = vmatpush1.msra.mxu0 0.0
        %916 = vmatprep.subr.mxu0 0.0
        %917 = vmatpush1.msra.mxu0 0.0
        %918 = vmatprep.subr.mxu0 0.0
        %919 = vmatpush1.msra.mxu0 0.0
        %920 = vmatprep.subr.mxu0 0.0
        %921 = vmatpush1.msra.mxu0 0.0
        %922 = vmatprep.subr.mxu0 0.0
        %923 = vmatpush1.msra.mxu0 0.0
        %924 = vmatprep.subr.mxu0 0.0
        %925 = vmatpush1.msra.mxu0 0.0
        %926 = vmatprep.subr.mxu0 0.0
        %927 = vmatpush1.msra.mxu0 0.0
        %928 = vmatprep.subr.mxu0 0.0
        %929 = vmatpush1.msra.mxu0 0.0
        %930 = vmatprep.subr.mxu0 0.0
        %931 = vmatpush1.msra.mxu0 0.0
        %932 = vmatprep.subr.mxu0 0.0
        %933 = vmatpush1.msra.mxu0 0.0
        %934 = vmatprep.subr.mxu0 0.0
        %935 = vmatpush1.msra.mxu0 0.0
        %936 = vmatprep.subr.mxu0 0.0
        %937 = vmatpush1.msra.mxu0 0.0
        %938 = vmatprep.subr.mxu0 0.0
        %939 = vmatpush1.msra.mxu0 0.0
        %940 = vmatprep.subr.mxu0 0.0
        %941 = vmatpush1.msra.mxu0 0.0
        %942 = vmatprep.subr.mxu0 0.0
        %943 = vmatpush1.msra.mxu0 0.0
        %944 = vmatprep.subr.mxu0 0.0
        %945 = vmatpush1.msra.mxu0 0.0
        %946 = vmatprep.subr.mxu0 0.0
        %947 = vmatpush1.msra.mxu0 0.0
        %948 = vmatprep.subr.mxu0 0.0
        %949 = vmatpush1.msra.mxu0 0.0
        %950 = vmatprep.mubr.f32.mxu0 0.0
        %951 = vmatmul.mubr.f32.gmra.mrb[0].mxu0 %v884
        %v952 = vpop.f32.mrb[0].mxu0
        %v953 = vadd.f32 0.0, %v952
        %v954 = vpop.f32.mrb[0].mxu0
        %955 = vdwg.mxu0
        %s956 = scalar_lea.vmem %s473, 8
        %v957 = vld [vmem:[%s956] sm:$0xff]
        %958 = vmatprep.subr.mxu0 0.0
        %959 = vmatpush1.msra.mxu0 %v957
        %960 = vmatprep.subr.mxu0 0.0
        %961 = vmatpush1.msra.mxu0 0.0
        %962 = vmatprep.subr.mxu0 0.0
        %963 = vmatpush1.msra.mxu0 0.0
        %964 = vmatprep.subr.mxu0 0.0
        %965 = vmatpush1.msra.mxu0 0.0
        %966 = vmatprep.subr.mxu0 0.0
        %967 = vmatpush1.msra.mxu0 0.0
        %968 = vmatprep.subr.mxu0 0.0
        %969 = vmatpush1.msra.mxu0 0.0
        %970 = vmatprep.subr.mxu0 0.0
        %971 = vmatpush1.msra.mxu0 0.0
        %972 = vmatprep.subr.mxu0 0.0
        %973 = vmatpush1.msra.mxu0 0.0
        %974 = vmatprep.subr.mxu0 0.0
        %975 = vmatpush1.msra.mxu0 0.0
        %976 = vmatprep.subr.mxu0 0.0
        %977 = vmatpush1.msra.mxu0 0.0
        %978 = vmatprep.subr.mxu0 0.0
        %979 = vmatpush1.msra.mxu0 0.0
        %980 = vmatprep.subr.mxu0 0.0
        %981 = vmatpush1.msra.mxu0 0.0
        %982 = vmatprep.subr.mxu0 0.0
        %983 = vmatpush1.msra.mxu0 0.0
        %984 = vmatprep.subr.mxu0 0.0
        %985 = vmatpush1.msra.mxu0 0.0
        %986 = vmatprep.subr.mxu0 0.0
        %987 = vmatpush1.msra.mxu0 0.0
        %988 = vmatprep.subr.mxu0 0.0
        %989 = vmatpush1.msra.mxu0 0.0
        %990 = vmatprep.subr.mxu0 0.0
        %991 = vmatpush1.msra.mxu0 0.0
        %992 = vmatprep.subr.mxu0 0.0
        %993 = vmatpush1.msra.mxu0 0.0
        %994 = vmatprep.subr.mxu0 0.0
        %995 = vmatpush1.msra.mxu0 0.0
        %996 = vmatprep.subr.mxu0 0.0
        %997 = vmatpush1.msra.mxu0 0.0
        %998 = vmatprep.subr.mxu0 0.0
        %999 = vmatpush1.msra.mxu0 0.0
        %1000 = vmatprep.subr.mxu0 0.0
        %1001 = vmatpush1.msra.mxu0 0.0
        %1002 = vmatprep.subr.mxu0 0.0
        %1003 = vmatpush1.msra.mxu0 0.0
        %1004 = vmatprep.subr.mxu0 0.0
        %1005 = vmatpush1.msra.mxu0 0.0
        %1006 = vmatprep.subr.mxu0 0.0
        %1007 = vmatpush1.msra.mxu0 0.0
        %1008 = vmatprep.subr.mxu0 0.0
        %1009 = vmatpush1.msra.mxu0 0.0
        %1010 = vmatprep.subr.mxu0 0.0
        %1011 = vmatpush1.msra.mxu0 0.0
        %1012 = vmatprep.subr.mxu0 0.0
        %1013 = vmatpush1.msra.mxu0 0.0
        %1014 = vmatprep.subr.mxu0 0.0
        %1015 = vmatpush1.msra.mxu0 0.0
        %1016 = vmatprep.subr.mxu0 0.0
        %1017 = vmatpush1.msra.mxu0 0.0
        %1018 = vmatprep.subr.mxu0 0.0
        %1019 = vmatpush1.msra.mxu0 0.0
        %1020 = vmatprep.subr.mxu0 0.0
        %1021 = vmatpush1.msra.mxu0 0.0
        %1022 = vmatprep.mubr.f32.mxu0 0.0
        %1023 = vmatmul.mubr.f32.gmra.mrb[0].mxu0 %v884
        %v1024 = vpop.f32.mrb[0].mxu0
        %v1025 = vadd.f32 0.0, %v1024
        %v1026 = vpop.f32.mrb[0].mxu0
        %1027 = vdwg.mxu0
        %1029 = vrot.lane.b32.xlu0 %v953, 4
        %v1030 = vpop.permute.xlu0 %1029
        %s1032 = scalar_lea.vmem %s450, 8 [#allocation3]
        %1033 = vst.msk [vmem:[%s1032] sm:$0xff] %vm761, %v1030
        %1035 = vrot.lane.b32.xlu0 %v1025, 12
        %v1036 = vpop.permute.xlu0 %1035
        %1038 = vst.msk [vmem:[%s1032] sm:$0xff] %vm767, %v1036
        %s1039 = scalar_lea.vmem %s458, 16
        %v1040 = vld [vmem:[%s1039] sm:$0xff]
        %s1041 = scalar_lea.vmem %s463, 16
        %v1042 = vld [vmem:[%s1041] sm:$0xff]
        %s1043 = scalar_lea.vmem %s481, 16
        %v1044 = vld [vmem:[%s1043] sm:$0xff]
        %v1046 = vsel %vm507, %v1040, 0
        %v1049 = vsel %vm507, %v1042, 0
        %1051 = vmatprep.subr.mxu0 0.0
        %1052 = vmatpush1.xpose.msra.mxu0 %v1049
        %1053 = vmatprep.subr.mxu0 0.0
        %1054 = vmatpush1.xpose.msra.mxu0 0.0
        %1055 = vmatprep.subr.mxu0 0.0
        %1056 = vmatpush1.xpose.msra.mxu0 0.0
        %1057 = vmatprep.subr.mxu0 0.0
        %1058 = vmatpush1.xpose.msra.mxu0 0.0
        %1059 = vmatprep.subr.mxu0 0.0
        %1060 = vmatpush1.xpose.msra.mxu0 0.0
        %1061 = vmatprep.subr.mxu0 0.0
        %1062 = vmatpush1.xpose.msra.mxu0 0.0
        %1063 = vmatprep.subr.mxu0 0.0
        %1064 = vmatpush1.xpose.msra.mxu0 0.0
        %1065 = vmatprep.subr.mxu0 0.0
        %1066 = vmatpush1.xpose.msra.mxu0 0.0
        %1067 = vmatprep.subr.mxu0 0.0
        %1068 = vmatpush1.xpose.msra.mxu0 0.0
        %1069 = vmatprep.subr.mxu0 0.0
        %1070 = vmatpush1.xpose.msra.mxu0 0.0
        %1071 = vmatprep.subr.mxu0 0.0
        %1072 = vmatpush1.xpose.msra.mxu0 0.0
        %1073 = vmatprep.subr.mxu0 0.0
        %1074 = vmatpush1.xpose.msra.mxu0 0.0
        %1075 = vmatprep.subr.mxu0 0.0
        %1076 = vmatpush1.xpose.msra.mxu0 0.0
        %1077 = vmatprep.subr.mxu0 0.0
        %1078 = vmatpush1.xpose.msra.mxu0 0.0
        %1079 = vmatprep.subr.mxu0 0.0
        %1080 = vmatpush1.xpose.msra.mxu0 0.0
        %1081 = vmatprep.subr.mxu0 0.0
        %1082 = vmatpush1.xpose.msra.mxu0 0.0
        %1083 = vmatprep.subr.mxu0 0.0
        %1084 = vmatpush1.xpose.msra.mxu0 0.0
        %1085 = vmatprep.subr.mxu0 0.0
        %1086 = vmatpush1.xpose.msra.mxu0 0.0
        %1087 = vmatprep.subr.mxu0 0.0
        %1088 = vmatpush1.xpose.msra.mxu0 0.0
        %1089 = vmatprep.subr.mxu0 0.0
        %1090 = vmatpush1.xpose.msra.mxu0 0.0
        %1091 = vmatprep.subr.mxu0 0.0
        %1092 = vmatpush1.xpose.msra.mxu0 0.0
        %1093 = vmatprep.subr.mxu0 0.0
        %1094 = vmatpush1.xpose.msra.mxu0 0.0
        %1095 = vmatprep.subr.mxu0 0.0
        %1096 = vmatpush1.xpose.msra.mxu0 0.0
        %1097 = vmatprep.subr.mxu0 0.0
        %1098 = vmatpush1.xpose.msra.mxu0 0.0
        %1099 = vmatprep.subr.mxu0 0.0
        %1100 = vmatpush1.xpose.msra.mxu0 0.0
        %1101 = vmatprep.subr.mxu0 0.0
        %1102 = vmatpush1.xpose.msra.mxu0 0.0
        %1103 = vmatprep.subr.mxu0 0.0
        %1104 = vmatpush1.xpose.msra.mxu0 0.0
        %1105 = vmatprep.subr.mxu0 0.0
        %1106 = vmatpush1.xpose.msra.mxu0 0.0
        %1107 = vmatprep.subr.mxu0 0.0
        %1108 = vmatpush1.xpose.msra.mxu0 0.0
        %1109 = vmatprep.subr.mxu0 0.0
        %1110 = vmatpush1.xpose.msra.mxu0 0.0
        %1111 = vmatprep.subr.mxu0 0.0
        %1112 = vmatpush1.xpose.msra.mxu0 0.0
        %1113 = vmatprep.subr.mxu0 0.0
        %1114 = vmatpush1.xpose.msra.mxu0 0.0
        %1115 = vmatprep.mubr.f32.mxu0 0.0
        %1116 = vmatmul.mubr.f32.gmra.mrb[0].mxu0 %v1046
        %v1117 = vpop.f32.mrb[0].mxu0
        %v1118 = vadd.f32 %v1044, %v1117
        %v1119 = vpop.f32.mrb[0].mxu0
        %1120 = vdwg.mxu0
        %s1121 = scalar_lea.vmem %s489, 16
        %v1122 = vld [vmem:[%s1121] sm:$0xff]
        %1124 = vset.pattern.permute.xlu0 0
        %1125 = vperm.xlu0 %1124, %v1122
        %v1126 = vpop.permute.xlu0 %1125
        %v1128 = vadd.f32 %v1118, %v1126
        %s1129 = scalar_lea.vmem %s493, 2
        %v1130 = vld [vmem:[%s1129] sm:$0x1]
        %v1132 = vlaneseq
        %v1133 = vshrl.u32 %v1132, 7
        %v1134 = vsub.s32 0, %v1133
        %v1135 = vrot.slane %v1130, %v1134
        %v1137 = vadd.f32 %v1128, %v1135
        %v1138 = vsel %vm599, %v1137, -inf
        %1139 = vmax.xlane.f32.xlu0 %v1138
        %v1140 = vpop.xlane.xlu0 %1139
        %v1141 = vsub.f32 %v1137, %v1140
        %v1142 = vmul.f32 %v1141, 1.442695
        %v1143 = vpow.pop %v1142
        %v1144 = vsel %vm599, %v1143, 0.0
        %1145 = vadd.xlane.f32.xlu0 %v1144
        %v1146 = vpop.xlane.xlu0 %1145
        %v1147 = vrcp.pop %v1146
        %v1148 = vmul.f32 %v1143, %v1147
        %s1149 = scalar_lea.vmem [#allocation2], 16
        %1150 = vst.msk [vmem:[%s1149] sm:$0xff] %vm599, %v1148
        %s1151 = scalar_lea.vmem %s468, 16
        %v1152 = vld [vmem:[%s1151] sm:$0xff]
        %v1154 = vsel %vm599, %v1148, 0
        %1156 = vmatprep.subr.mxu0 0.0
        %1157 = vmatpush1.msra.mxu0 %v1152
        %1158 = vmatprep.subr.mxu0 0.0
        %1159 = vmatpush1.msra.mxu0 0.0
        %1160 = vmatprep.subr.mxu0 0.0
        %1161 = vmatpush1.msra.mxu0 0.0
        %1162 = vmatprep.subr.mxu0 0.0
        %1163 = vmatpush1.msra.mxu0 0.0
        %1164 = vmatprep.subr.mxu0 0.0
        %1165 = vmatpush1.msra.mxu0 0.0
        %1166 = vmatprep.subr.mxu0 0.0
        %1167 = vmatpush1.msra.mxu0 0.0
        %1168 = vmatprep.subr.mxu0 0.0
        %1169 = vmatpush1.msra.mxu0 0.0
        %1170 = vmatprep.subr.mxu0 0.0
        %1171 = vmatpush1.msra.mxu0 0.0
        %1172 = vmatprep.subr.mxu0 0.0
        %1173 = vmatpush1.msra.mxu0 0.0
        %1174 = vmatprep.subr.mxu0 0.0
        %1175 = vmatpush1.msra.mxu0 0.0
        %1176 = vmatprep.subr.mxu0 0.0
        %1177 = vmatpush1.msra.mxu0 0.0
        %1178 = vmatprep.subr.mxu0 0.0
        %1179 = vmatpush1.msra.mxu0 0.0
        %1180 = vmatprep.subr.mxu0 0.0
        %1181 = vmatpush1.msra.mxu0 0.0
        %1182 = vmatprep.subr.mxu0 0.0
        %1183 = vmatpush1.msra.mxu0 0.0
        %1184 = vmatprep.subr.mxu0 0.0
        %1185 = vmatpush1.msra.mxu0 0.0
        %1186 = vmatprep.subr.mxu0 0.0
        %1187 = vmatpush1.msra.mxu0 0.0
        %1188 = vmatprep.subr.mxu0 0.0
        %1189 = vmatpush1.msra.mxu0 0.0
        %1190 = vmatprep.subr.mxu0 0.0
        %1191 = vmatpush1.msra.mxu0 0.0
        %1192 = vmatprep.subr.mxu0 0.0
        %1193 = vmatpush1.msra.mxu0 0.0
        %1194 = vmatprep.subr.mxu0 0.0
        %1195 = vmatpush1.msra.mxu0 0.0
        %1196 = vmatprep.subr.mxu0 0.0
        %1197 = vmatpush1.msra.mxu0 0.0
        %1198 = vmatprep.subr.mxu0 0.0
        %1199 = vmatpush1.msra.mxu0 0.0
        %1200 = vmatprep.subr.mxu0 0.0
        %1201 = vmatpush1.msra.mxu0 0.0
        %1202 = vmatprep.subr.mxu0 0.0
        %1203 = vmatpush1.msra.mxu0 0.0
        %1204 = vmatprep.subr.mxu0 0.0
        %1205 = vmatpush1.msra.mxu0 0.0
        %1206 = vmatprep.subr.mxu0 0.0
        %1207 = vmatpush1.msra.mxu0 0.0
        %1208 = vmatprep.subr.mxu0 0.0
        %1209 = vmatpush1.msra.mxu0 0.0
        %1210 = vmatprep.subr.mxu0 0.0
        %1211 = vmatpush1.msra.mxu0 0.0
        %1212 = vmatprep.subr.mxu0 0.0
        %1213 = vmatpush1.msra.mxu0 0.0
        %1214 = vmatprep.subr.mxu0 0.0
        %1215 = vmatpush1.msra.mxu0 0.0
        %1216 = vmatprep.subr.mxu0 0.0
        %1217 = vmatpush1.msra.mxu0 0.0
        %1218 = vmatprep.subr.mxu0 0.0
        %1219 = vmatpush1.msra.mxu0 0.0
        %1220 = vmatprep.mubr.f32.mxu0 0.0
        %1221 = vmatmul.mubr.f32.gmra.mrb[0].mxu0 %v1154
        %v1222 = vpop.f32.mrb[0].mxu0
        %v1223 = vadd.f32 0.0, %v1222
        %v1224 = vpop.f32.mrb[0].mxu0
        %1225 = vdwg.mxu0
        %s1226 = scalar_lea.vmem %s473, 16
        %v1227 = vld [vmem:[%s1226] sm:$0xff]
        %1228 = vmatprep.subr.mxu0 0.0
        %1229 = vmatpush1.msra.mxu0 %v1227
        %1230 = vmatprep.subr.mxu0 0.0
        %1231 = vmatpush1.msra.mxu0 0.0
        %1232 = vmatprep.subr.mxu0 0.0
        %1233 = vmatpush1.msra.mxu0 0.0
        %1234 = vmatprep.subr.mxu0 0.0
        %1235 = vmatpush1.msra.mxu0 0.0
        %1236 = vmatprep.subr.mxu0 0.0
        %1237 = vmatpush1.msra.mxu0 0.0
        %1238 = vmatprep.subr.mxu0 0.0
        %1239 = vmatpush1.msra.mxu0 0.0
        %1240 = vmatprep.subr.mxu0 0.0
        %1241 = vmatpush1.msra.mxu0 0.0
        %1242 = vmatprep.subr.mxu0 0.0
        %1243 = vmatpush1.msra.mxu0 0.0
        %1244 = vmatprep.subr.mxu0 0.0
        %1245 = vmatpush1.msra.mxu0 0.0
        %1246 = vmatprep.subr.mxu0 0.0
        %1247 = vmatpush1.msra.mxu0 0.0
        %1248 = vmatprep.subr.mxu0 0.0
        %1249 = vmatpush1.msra.mxu0 0.0
        %1250 = vmatprep.subr.mxu0 0.0
        %1251 = vmatpush1.msra.mxu0 0.0
        %1252 = vmatprep.subr.mxu0 0.0
        %1253 = vmatpush1.msra.mxu0 0.0
        %1254 = vmatprep.subr.mxu0 0.0
        %1255 = vmatpush1.msra.mxu0 0.0
        %1256 = vmatprep.subr.mxu0 0.0
        %1257 = vmatpush1.msra.mxu0 0.0
        %1258 = vmatprep.subr.mxu0 0.0
        %1259 = vmatpush1.msra.mxu0 0.0
        %1260 = vmatprep.subr.mxu0 0.0
        %1261 = vmatpush1.msra.mxu0 0.0
        %1262 = vmatprep.subr.mxu0 0.0
        %1263 = vmatpush1.msra.mxu0 0.0
        %1264 = vmatprep.subr.mxu0 0.0
        %1265 = vmatpush1.msra.mxu0 0.0
        %1266 = vmatprep.subr.mxu0 0.0
        %1267 = vmatpush1.msra.mxu0 0.0
        %1268 = vmatprep.subr.mxu0 0.0
        %1269 = vmatpush1.msra.mxu0 0.0
        %1270 = vmatprep.subr.mxu0 0.0
        %1271 = vmatpush1.msra.mxu0 0.0
        %1272 = vmatprep.subr.mxu0 0.0
        %1273 = vmatpush1.msra.mxu0 0.0
        %1274 = vmatprep.subr.mxu0 0.0
        %1275 = vmatpush1.msra.mxu0 0.0
        %1276 = vmatprep.subr.mxu0 0.0
        %1277 = vmatpush1.msra.mxu0 0.0
        %1278 = vmatprep.subr.mxu0 0.0
        %1279 = vmatpush1.msra.mxu0 0.0
        %1280 = vmatprep.subr.mxu0 0.0
        %1281 = vmatpush1.msra.mxu0 0.0
        %1282 = vmatprep.subr.mxu0 0.0
        %1283 = vmatpush1.msra.mxu0 0.0
        %1284 = vmatprep.subr.mxu0 0.0
        %1285 = vmatpush1.msra.mxu0 0.0
        %1286 = vmatprep.subr.mxu0 0.0
        %1287 = vmatpush1.msra.mxu0 0.0
        %1288 = vmatprep.subr.mxu0 0.0
        %1289 = vmatpush1.msra.mxu0 0.0
        %1290 = vmatprep.subr.mxu0 0.0
        %1291 = vmatpush1.msra.mxu0 0.0
        %1292 = vmatprep.mubr.f32.mxu0 0.0
        %1293 = vmatmul.mubr.f32.gmra.mrb[0].mxu0 %v1154
        %v1294 = vpop.f32.mrb[0].mxu0
        %v1295 = vadd.f32 0.0, %v1294
        %v1296 = vpop.f32.mrb[0].mxu0
        %1297 = vdwg.mxu0
        %1299 = vrot.lane.b32.xlu0 %v1223, 4
        %v1300 = vpop.permute.xlu0 %1299
        %s1302 = scalar_lea.vmem %s450, 16 [#allocation3]
        %1303 = vst.msk [vmem:[%s1302] sm:$0xff] %vm761, %v1300
        %1305 = vrot.lane.b32.xlu0 %v1295, 12
        %v1306 = vpop.permute.xlu0 %1305
        %1308 = vst.msk [vmem:[%s1302] sm:$0xff] %vm767, %v1306
        %s1309 = scalar_lea.vmem %s458, 24
        %v1310 = vld [vmem:[%s1309] sm:$0xff]
        %s1311 = scalar_lea.vmem %s463, 24
        %v1312 = vld [vmem:[%s1311] sm:$0xff]
        %s1313 = scalar_lea.vmem %s481, 24
        %v1314 = vld [vmem:[%s1313] sm:$0xff]
        %v1316 = vsel %vm507, %v1310, 0
        %v1319 = vsel %vm507, %v1312, 0
        %1321 = vmatprep.subr.mxu0 0.0
        %1322 = vmatpush1.xpose.msra.mxu0 %v1319
        %1323 = vmatprep.subr.mxu0 0.0
        %1324 = vmatpush1.xpose.msra.mxu0 0.0
        %1325 = vmatprep.subr.mxu0 0.0
        %1326 = vmatpush1.xpose.msra.mxu0 0.0
        %1327 = vmatprep.subr.mxu0 0.0
        %1328 = vmatpush1.xpose.msra.mxu0 0.0
        %1329 = vmatprep.subr.mxu0 0.0
        %1330 = vmatpush1.xpose.msra.mxu0 0.0
        %1331 = vmatprep.subr.mxu0 0.0
        %1332 = vmatpush1.xpose.msra.mxu0 0.0
        %1333 = vmatprep.subr.mxu0 0.0
        %1334 = vmatpush1.xpose.msra.mxu0 0.0
        %1335 = vmatprep.subr.mxu0 0.0
        %1336 = vmatpush1.xpose.msra.mxu0 0.0
        %1337 = vmatprep.subr.mxu0 0.0
        %1338 = vmatpush1.xpose.msra.mxu0 0.0
        %1339 = vmatprep.subr.mxu0 0.0
        %1340 = vmatpush1.xpose.msra.mxu0 0.0
        %1341 = vmatprep.subr.mxu0 0.0
        %1342 = vmatpush1.xpose.msra.mxu0 0.0
        %1343 = vmatprep.subr.mxu0 0.0
        %1344 = vmatpush1.xpose.msra.mxu0 0.0
        %1345 = vmatprep.subr.mxu0 0.0
        %1346 = vmatpush1.xpose.msra.mxu0 0.0
        %1347 = vmatprep.subr.mxu0 0.0
        %1348 = vmatpush1.xpose.msra.mxu0 0.0
        %1349 = vmatprep.subr.mxu0 0.0
        %1350 = vmatpush1.xpose.msra.mxu0 0.0
        %1351 = vmatprep.subr.mxu0 0.0
        %1352 = vmatpush1.xpose.msra.mxu0 0.0
        %1353 = vmatprep.subr.mxu0 0.0
        %1354 = vmatpush1.xpose.msra.mxu0 0.0
        %1355 = vmatprep.subr.mxu0 0.0
        %1356 = vmatpush1.xpose.msra.mxu0 0.0
        %1357 = vmatprep.subr.mxu0 0.0
        %1358 = vmatpush1.xpose.msra.mxu0 0.0
        %1359 = vmatprep.subr.mxu0 0.0
        %1360 = vmatpush1.xpose.msra.mxu0 0.0
        %1361 = vmatprep.subr.mxu0 0.0
        %1362 = vmatpush1.xpose.msra.mxu0 0.0
        %1363 = vmatprep.subr.mxu0 0.0
        %1364 = vmatpush1.xpose.msra.mxu0 0.0
        %1365 = vmatprep.subr.mxu0 0.0
        %1366 = vmatpush1.xpose.msra.mxu0 0.0
        %1367 = vmatprep.subr.mxu0 0.0
        %1368 = vmatpush1.xpose.msra.mxu0 0.0
        %1369 = vmatprep.subr.mxu0 0.0
        %1370 = vmatpush1.xpose.msra.mxu0 0.0
        %1371 = vmatprep.subr.mxu0 0.0
        %1372 = vmatpush1.xpose.msra.mxu0 0.0
        %1373 = vmatprep.subr.mxu0 0.0
        %1374 = vmatpush1.xpose.msra.mxu0 0.0
        %1375 = vmatprep.subr.mxu0 0.0
        %1376 = vmatpush1.xpose.msra.mxu0 0.0
        %1377 = vmatprep.subr.mxu0 0.0
        %1378 = vmatpush1.xpose.msra.mxu0 0.0
        %1379 = vmatprep.subr.mxu0 0.0
        %1380 = vmatpush1.xpose.msra.mxu0 0.0
        %1381 = vmatprep.subr.mxu0 0.0
        %1382 = vmatpush1.xpose.msra.mxu0 0.0
        %1383 = vmatprep.subr.mxu0 0.0
        %1384 = vmatpush1.xpose.msra.mxu0 0.0
        %1385 = vmatprep.mubr.f32.mxu0 0.0
        %1386 = vmatmul.mubr.f32.gmra.mrb[0].mxu0 %v1316
        %v1387 = vpop.f32.mrb[0].mxu0
        %v1388 = vadd.f32 %v1314, %v1387
        %v1389 = vpop.f32.mrb[0].mxu0
        %1390 = vdwg.mxu0
        %s1391 = scalar_lea.vmem %s489, 24
        %v1392 = vld [vmem:[%s1391] sm:$0xff]
        %1394 = vset.pattern.permute.xlu0 0
        %1395 = vperm.xlu0 %1394, %v1392
        %v1396 = vpop.permute.xlu0 %1395
        %v1398 = vadd.f32 %v1388, %v1396
        %s1399 = scalar_lea.vmem %s493, 3
        %v1400 = vld [vmem:[%s1399] sm:$0x1]
        %v1402 = vlaneseq
        %v1403 = vshrl.u32 %v1402, 7
        %v1404 = vsub.s32 0, %v1403
        %v1405 = vrot.slane %v1400, %v1404
        %v1407 = vadd.f32 %v1398, %v1405
        %v1408 = vsel %vm599, %v1407, -inf
        %1409 = vmax.xlane.f32.xlu0 %v1408
        %v1410 = vpop.xlane.xlu0 %1409
        %v1411 = vsub.f32 %v1407, %v1410
        %v1412 = vmul.f32 %v1411, 1.442695
        %v1413 = vpow.pop %v1412
        %v1414 = vsel %vm599, %v1413, 0.0
        %1415 = vadd.xlane.f32.xlu0 %v1414
        %v1416 = vpop.xlane.xlu0 %1415
        %v1417 = vrcp.pop %v1416
        %v1418 = vmul.f32 %v1413, %v1417
        %s1419 = scalar_lea.vmem [#allocation2], 24
        %1420 = vst.msk [vmem:[%s1419] sm:$0xff] %vm599, %v1418
        %s1421 = scalar_lea.vmem %s468, 24
        %v1422 = vld [vmem:[%s1421] sm:$0xff]
        %v1424 = vsel %vm599, %v1418, 0
        %1426 = vmatprep.subr.mxu0 0.0
        %1427 = vmatpush1.msra.mxu0 %v1422
        %1428 = vmatprep.subr.mxu0 0.0
        %1429 = vmatpush1.msra.mxu0 0.0
        %1430 = vmatprep.subr.mxu0 0.0
        %1431 = vmatpush1.msra.mxu0 0.0
        %1432 = vmatprep.subr.mxu0 0.0
        %1433 = vmatpush1.msra.mxu0 0.0
        %1434 = vmatprep.subr.mxu0 0.0
        %1435 = vmatpush1.msra.mxu0 0.0
        %1436 = vmatprep.subr.mxu0 0.0
        %1437 = vmatpush1.msra.mxu0 0.0
        %1438 = vmatprep.subr.mxu0 0.0
        %1439 = vmatpush1.msra.mxu0 0.0
        %1440 = vmatprep.subr.mxu0 0.0
        %1441 = vmatpush1.msra.mxu0 0.0
        %1442 = vmatprep.subr.mxu0 0.0
        %1443 = vmatpush1.msra.mxu0 0.0
        %1444 = vmatprep.subr.mxu0 0.0
        %1445 = vmatpush1.msra.mxu0 0.0
        %1446 = vmatprep.subr.mxu0 0.0
        %1447 = vmatpush1.msra.mxu0 0.0
        %1448 = vmatprep.subr.mxu0 0.0
        %1449 = vmatpush1.msra.mxu0 0.0
        %1450 = vmatprep.subr.mxu0 0.0
        %1451 = vmatpush1.msra.mxu0 0.0
        %1452 = vmatprep.subr.mxu0 0.0
        %1453 = vmatpush1.msra.mxu0 0.0
        %1454 = vmatprep.subr.mxu0 0.0
        %1455 = vmatpush1.msra.mxu0 0.0
        %1456 = vmatprep.subr.mxu0 0.0
        %1457 = vmatpush1.msra.mxu0 0.0
        %1458 = vmatprep.subr.mxu0 0.0
        %1459 = vmatpush1.msra.mxu0 0.0
        %1460 = vmatprep.subr.mxu0 0.0
        %1461 = vmatpush1.msra.mxu0 0.0
        %1462 = vmatprep.subr.mxu0 0.0
        %1463 = vmatpush1.msra.mxu0 0.0
        %1464 = vmatprep.subr.mxu0 0.0
        %1465 = vmatpush1.msra.mxu0 0.0
        %1466 = vmatprep.subr.mxu0 0.0
        %1467 = vmatpush1.msra.mxu0 0.0
        %1468 = vmatprep.subr.mxu0 0.0
        %1469 = vmatpush1.msra.mxu0 0.0
        %1470 = vmatprep.subr.mxu0 0.0
        %1471 = vmatpush1.msra.mxu0 0.0
        %1472 = vmatprep.subr.mxu0 0.0
        %1473 = vmatpush1.msra.mxu0 0.0
        %1474 = vmatprep.subr.mxu0 0.0
        %1475 = vmatpush1.msra.mxu0 0.0
        %1476 = vmatprep.subr.mxu0 0.0
        %1477 = vmatpush1.msra.mxu0 0.0
        %1478 = vmatprep.subr.mxu0 0.0
        %1479 = vmatpush1.msra.mxu0 0.0
        %1480 = vmatprep.subr.mxu0 0.0
        %1481 = vmatpush1.msra.mxu0 0.0
        %1482 = vmatprep.subr.mxu0 0.0
        %1483 = vmatpush1.msra.mxu0 0.0
        %1484 = vmatprep.subr.mxu0 0.0
        %1485 = vmatpush1.msra.mxu0 0.0
        %1486 = vmatprep.subr.mxu0 0.0
        %1487 = vmatpush1.msra.mxu0 0.0
        %1488 = vmatprep.subr.mxu0 0.0
        %1489 = vmatpush1.msra.mxu0 0.0
        %1490 = vmatprep.mubr.f32.mxu0 0.0
        %1491 = vmatmul.mubr.f32.gmra.mrb[0].mxu0 %v1424
        %v1492 = vpop.f32.mrb[0].mxu0
        %v1493 = vadd.f32 0.0, %v1492
        %v1494 = vpop.f32.mrb[0].mxu0
        %1495 = vdwg.mxu0
        %s1496 = scalar_lea.vmem %s473, 24
        %v1497 = vld [vmem:[%s1496] sm:$0xff]
        %1498 = vmatprep.subr.mxu0 0.0
        %1499 = vmatpush1.msra.mxu0 %v1497
        %1500 = vmatprep.subr.mxu0 0.0
        %1501 = vmatpush1.msra.mxu0 0.0
        %1502 = vmatprep.subr.mxu0 0.0
        %1503 = vmatpush1.msra.mxu0 0.0
        %1504 = vmatprep.subr.mxu0 0.0
        %1505 = vmatpush1.msra.mxu0 0.0
        %1506 = vmatprep.subr.mxu0 0.0
        %1507 = vmatpush1.msra.mxu0 0.0
        %1508 = vmatprep.subr.mxu0 0.0
        %1509 = vmatpush1.msra.mxu0 0.0
        %1510 = vmatprep.subr.mxu0 0.0
        %1511 = vmatpush1.msra.mxu0 0.0
        %1512 = vmatprep.subr.mxu0 0.0
        %1513 = vmatpush1.msra.mxu0 0.0
        %1514 = vmatprep.subr.mxu0 0.0
        %1515 = vmatpush1.msra.mxu0 0.0
        %1516 = vmatprep.subr.mxu0 0.0
        %1517 = vmatpush1.msra.mxu0 0.0
        %1518 = vmatprep.subr.mxu0 0.0
        %1519 = vmatpush1.msra.mxu0 0.0
        %1520 = vmatprep.subr.mxu0 0.0
        %1521 = vmatpush1.msra.mxu0 0.0
        %1522 = vmatprep.subr.mxu0 0.0
        %1523 = vmatpush1.msra.mxu0 0.0
        %1524 = vmatprep.subr.mxu0 0.0
        %1525 = vmatpush1.msra.mxu0 0.0
        %1526 = vmatprep.subr.mxu0 0.0
        %1527 = vmatpush1.msra.mxu0 0.0
        %1528 = vmatprep.subr.mxu0 0.0
        %1529 = vmatpush1.msra.mxu0 0.0
        %1530 = vmatprep.subr.mxu0 0.0
        %1531 = vmatpush1.msra.mxu0 0.0
        %1532 = vmatprep.subr.mxu0 0.0
        %1533 = vmatpush1.msra.mxu0 0.0
        %1534 = vmatprep.subr.mxu0 0.0
        %1535 = vmatpush1.msra.mxu0 0.0
        %1536 = vmatprep.subr.mxu0 0.0
        %1537 = vmatpush1.msra.mxu0 0.0
        %1538 = vmatprep.subr.mxu0 0.0
        %1539 = vmatpush1.msra.mxu0 0.0
        %1540 = vmatprep.subr.mxu0 0.0
        %1541 = vmatpush1.msra.mxu0 0.0
        %1542 = vmatprep.subr.mxu0 0.0
        %1543 = vmatpush1.msra.mxu0 0.0
        %1544 = vmatprep.subr.mxu0 0.0
        %1545 = vmatpush1.msra.mxu0 0.0
        %1546 = vmatprep.subr.mxu0 0.0
        %1547 = vmatpush1.msra.mxu0 0.0
        %1548 = vmatprep.subr.mxu0 0.0
        %1549 = vmatpush1.msra.mxu0 0.0
        %1550 = vmatprep.subr.mxu0 0.0
        %1551 = vmatpush1.msra.mxu0 0.0
        %1552 = vmatprep.subr.mxu0 0.0
        %1553 = vmatpush1.msra.mxu0 0.0
        %1554 = vmatprep.subr.mxu0 0.0
        %1555 = vmatpush1.msra.mxu0 0.0
        %1556 = vmatprep.subr.mxu0 0.0
        %1557 = vmatpush1.msra.mxu0 0.0
        %1558 = vmatprep.subr.mxu0 0.0
        %1559 = vmatpush1.msra.mxu0 0.0
        %1560 = vmatprep.subr.mxu0 0.0
        %1561 = vmatpush1.msra.mxu0 0.0
        %1562 = vmatprep.mubr.f32.mxu0 0.0
        %1563 = vmatmul.mubr.f32.gmra.mrb[0].mxu0 %v1424
        %v1564 = vpop.f32.mrb[0].mxu0
        %v1565 = vadd.f32 0.0, %v1564
        %v1566 = vpop.f32.mrb[0].mxu0
        %1567 = vdwg.mxu0
        %1569 = vrot.lane.b32.xlu0 %v1493, 4
        %v1570 = vpop.permute.xlu0 %1569
        %s1572 = scalar_lea.vmem %s450, 24 [#allocation3]
        %1573 = vst.msk [vmem:[%s1572] sm:$0xff] %vm761, %v1570
        %1575 = vrot.lane.b32.xlu0 %v1565, 12
        %v1576 = vpop.permute.xlu0 %1575
        %1578 = vst.msk [vmem:[%s1572] sm:$0xff] %vm767, %v1576
        %v1579 = vld [vmem:[#allocation2] sm:$0xff]
        %v1580 = vld [vmem:[#allocation2 + $0x8] sm:$0xff]
        %v1581 = vld [vmem:[#allocation2 + $0x10] sm:$0xff]
        %v1582 = vld [vmem:[#allocation2 + $0x18] sm:$0xff]
        %v1583 = vcombine.low %v1579, %v1581
        %v1584 = vcombine.high %v1579, %v1581
        %v1586 = vunpack.c.l.s4 1983009808
        %v1587 = vunpack.c.0.s8 %v1586
        %v1588 = vlaneseq
        %v1589 = vshrl.u32 %v1588, 7
        %v1590 = vsub.s32 %v1587, %v1589
        %v1591 = vrot.slane %v1583, %v1590
        %v1593 = vunpack.c.l.s4 1983009808
        %v1594 = vunpack.c.0.s8 %v1593
        %v1595 = vlaneseq
        %v1596 = vshrl.u32 %v1595, 7
        %v1597 = vsub.s32 %v1594, %v1596
        %v1598 = vrot.slane %v1584, %v1597
        %v1599 = vcombine.low %v1580, %v1582
        %v1600 = vcombine.high %v1580, %v1582
        %v1602 = vunpack.c.l.s4 1983009808
        %v1603 = vunpack.c.0.s8 %v1602
        %v1604 = vlaneseq
        %v1605 = vshrl.u32 %v1604, 7
        %v1606 = vsub.s32 %v1603, %v1605
        %v1607 = vrot.slane %v1599, %v1606
        %v1609 = vunpack.c.l.s4 1983009808
        %v1610 = vunpack.c.0.s8 %v1609
        %v1611 = vlaneseq
        %v1612 = vshrl.u32 %v1611, 7
        %v1613 = vsub.s32 %v1610, %v1612
        %v1614 = vrot.slane %v1600, %v1613
        %v1615 = vcombine.low %v1591, %v1607
        %v1616 = vcombine.high %v1591, %v1607
        %v1618 = vunpack.c.l.s4 1934713408
        %v1619 = vunpack.c.0.s8 %v1618
        %v1620 = vlaneseq
        %v1621 = vshrl.u32 %v1620, 7
        %v1622 = vsub.s32 %v1619, %v1621
        %v1623 = vrot.slane %v1615, %v1622
        %v1625 = vunpack.c.l.s4 1934713408
        %v1626 = vunpack.c.0.s8 %v1625
        %v1627 = vlaneseq
        %v1628 = vshrl.u32 %v1627, 7
        %v1629 = vsub.s32 %v1626, %v1628
        %v1630 = vrot.slane %v1616, %v1629
        %v1631 = vcombine.low %v1598, %v1614
        %v1632 = vcombine.high %v1598, %v1614
        %v1634 = vunpack.c.l.s4 1934713408
        %v1635 = vunpack.c.0.s8 %v1634
        %v1636 = vlaneseq
        %v1637 = vshrl.u32 %v1636, 7
        %v1638 = vsub.s32 %v1635, %v1637
        %v1639 = vrot.slane %v1631, %v1638
        %v1641 = vunpack.c.l.s4 1934713408
        %v1642 = vunpack.c.0.s8 %v1641
        %v1643 = vlaneseq
        %v1644 = vshrl.u32 %v1643, 7
        %v1645 = vsub.s32 %v1642, %v1644
        %v1646 = vrot.slane %v1632, %v1645
        %v1647 = vcombine.high %v1623, 0.0
        %v1648 = vcombine.high %v1630, 0.0
        %v1649 = vcombine.high %v1639, 0.0
        %v1650 = vcombine.high %v1646, 0.0
        %v1651 = vld [vmem:[%s502] sm:$0xff]
        %v1652 = vld [vmem:[%s502 + $0x8] sm:$0xff]
        %v1653 = vld [vmem:[%s502 + $0x10] sm:$0xff]
        %v1654 = vld [vmem:[%s502 + $0x18] sm:$0xff]
        %v1655 = vld [vmem:[%s502 + $0x20] sm:$0xff]
        %v1656 = vld [vmem:[%s502 + $0x28] sm:$0xff]
        %v1657 = vld [vmem:[%s502 + $0x30] sm:$0xff]
        %v1658 = vld [vmem:[%s502 + $0x38] sm:$0xff]
        %v1660 = vsel %vm599, %v1623, 0
        %1662 = vmatprep.subr.mxu0 0.0
        %1663 = vmatpush1.msra.mxu0 %v1651
        %1664 = vmatprep.subr.mxu0 0.0
        %1665 = vmatpush1.msra.mxu0 0.0
        %1666 = vmatprep.subr.mxu0 0.0
        %1667 = vmatpush1.msra.mxu0 0.0
        %1668 = vmatprep.subr.mxu0 0.0
        %1669 = vmatpush1.msra.mxu0 0.0
        %1670 = vmatprep.subr.mxu0 0.0
        %1671 = vmatpush1.msra.mxu0 0.0
        %1672 = vmatprep.subr.mxu0 0.0
        %1673 = vmatpush1.msra.mxu0 0.0
        %1674 = vmatprep.subr.mxu0 0.0
        %1675 = vmatpush1.msra.mxu0 0.0
        %1676 = vmatprep.subr.mxu0 0.0
        %1677 = vmatpush1.msra.mxu0 0.0
        %1678 = vmatprep.subr.mxu0 0.0
        %1679 = vmatpush1.msra.mxu0 0.0
        %1680 = vmatprep.subr.mxu0 0.0
        %1681 = vmatpush1.msra.mxu0 0.0
        %1682 = vmatprep.subr.mxu0 0.0
        %1683 = vmatpush1.msra.mxu0 0.0
        %1684 = vmatprep.subr.mxu0 0.0
        %1685 = vmatpush1.msra.mxu0 0.0
        %1686 = vmatprep.subr.mxu0 0.0
        %1687 = vmatpush1.msra.mxu0 0.0
        %1688 = vmatprep.subr.mxu0 0.0
        %1689 = vmatpush1.msra.mxu0 0.0
        %1690 = vmatprep.subr.mxu0 0.0
        %1691 = vmatpush1.msra.mxu0 0.0
        %1692 = vmatprep.subr.mxu0 0.0
        %1693 = vmatpush1.msra.mxu0 0.0
        %1694 = vmatprep.subr.mxu0 0.0
        %1695 = vmatpush1.msra.mxu0 0.0
        %1696 = vmatprep.subr.mxu0 0.0
        %1697 = vmatpush1.msra.mxu0 0.0
        %1698 = vmatprep.subr.mxu0 0.0
        %1699 = vmatpush1.msra.mxu0 0.0
        %1700 = vmatprep.subr.mxu0 0.0
        %1701 = vmatpush1.msra.mxu0 0.0
        %1702 = vmatprep.subr.mxu0 0.0
        %1703 = vmatpush1.msra.mxu0 0.0
        %1704 = vmatprep.subr.mxu0 0.0
        %1705 = vmatpush1.msra.mxu0 0.0
        %1706 = vmatprep.subr.mxu0 0.0
        %1707 = vmatpush1.msra.mxu0 0.0
        %1708 = vmatprep.subr.mxu0 0.0
        %1709 = vmatpush1.msra.mxu0 0.0
        %1710 = vmatprep.subr.mxu0 0.0
        %1711 = vmatpush1.msra.mxu0 0.0
        %1712 = vmatprep.subr.mxu0 0.0
        %1713 = vmatpush1.msra.mxu0 0.0
        %1714 = vmatprep.subr.mxu0 0.0
        %1715 = vmatpush1.msra.mxu0 0.0
        %1716 = vmatprep.subr.mxu0 0.0
        %1717 = vmatpush1.msra.mxu0 0.0
        %1718 = vmatprep.subr.mxu0 0.0
        %1719 = vmatpush1.msra.mxu0 0.0
        %1720 = vmatprep.subr.mxu0 0.0
        %1721 = vmatpush1.msra.mxu0 0.0
        %1722 = vmatprep.subr.mxu0 0.0
        %1723 = vmatpush1.msra.mxu0 0.0
        %1724 = vmatprep.subr.mxu0 0.0
        %1725 = vmatpush1.msra.mxu0 0.0
        %1726 = vmatprep.mubr.f32.mxu0 0.0
        %1727 = vmatmul.mubr.f32.gmra.mrb[0].mxu0 %v1660
        %v1728 = vpop.f32.mrb[0].mxu0
        %v1729 = vadd.f32 0.0, %v1728
        %v1730 = vpop.f32.mrb[0].mxu0
        %1731 = vdwg.mxu0
        %v1733 = vsel %vm599, %v1647, 0
        %1735 = vmatprep.subr.mxu0 0.0
        %1736 = vmatpush1.msra.mxu0 %v1652
        %1737 = vmatprep.subr.mxu0 0.0
        %1738 = vmatpush1.msra.mxu0 0.0
        %1739 = vmatprep.subr.mxu0 0.0
        %1740 = vmatpush1.msra.mxu0 0.0
        %1741 = vmatprep.subr.mxu0 0.0
        %1742 = vmatpush1.msra.mxu0 0.0
        %1743 = vmatprep.subr.mxu0 0.0
        %1744 = vmatpush1.msra.mxu0 0.0
        %1745 = vmatprep.subr.mxu0 0.0
        %1746 = vmatpush1.msra.mxu0 0.0
        %1747 = vmatprep.subr.mxu0 0.0
        %1748 = vmatpush1.msra.mxu0 0.0
        %1749 = vmatprep.subr.mxu0 0.0
        %1750 = vmatpush1.msra.mxu0 0.0
        %1751 = vmatprep.subr.mxu0 0.0
        %1752 = vmatpush1.msra.mxu0 0.0
        %1753 = vmatprep.subr.mxu0 0.0
        %1754 = vmatpush1.msra.mxu0 0.0
        %1755 = vmatprep.subr.mxu0 0.0
        %1756 = vmatpush1.msra.mxu0 0.0
        %1757 = vmatprep.subr.mxu0 0.0
        %1758 = vmatpush1.msra.mxu0 0.0
        %1759 = vmatprep.subr.mxu0 0.0
        %1760 = vmatpush1.msra.mxu0 0.0
        %1761 = vmatprep.subr.mxu0 0.0
        %1762 = vmatpush1.msra.mxu0 0.0
        %1763 = vmatprep.subr.mxu0 0.0
        %1764 = vmatpush1.msra.mxu0 0.0
        %1765 = vmatprep.subr.mxu0 0.0
        %1766 = vmatpush1.msra.mxu0 0.0
        %1767 = vmatprep.subr.mxu0 0.0
        %1768 = vmatpush1.msra.mxu0 0.0
        %1769 = vmatprep.subr.mxu0 0.0
        %1770 = vmatpush1.msra.mxu0 0.0
        %1771 = vmatprep.subr.mxu0 0.0
        %1772 = vmatpush1.msra.mxu0 0.0
        %1773 = vmatprep.subr.mxu0 0.0
        %1774 = vmatpush1.msra.mxu0 0.0
        %1775 = vmatprep.subr.mxu0 0.0
        %1776 = vmatpush1.msra.mxu0 0.0
        %1777 = vmatprep.subr.mxu0 0.0
        %1778 = vmatpush1.msra.mxu0 0.0
        %1779 = vmatprep.subr.mxu0 0.0
        %1780 = vmatpush1.msra.mxu0 0.0
        %1781 = vmatprep.subr.mxu0 0.0
        %1782 = vmatpush1.msra.mxu0 0.0
        %1783 = vmatprep.subr.mxu0 0.0
        %1784 = vmatpush1.msra.mxu0 0.0
        %1785 = vmatprep.subr.mxu0 0.0
        %1786 = vmatpush1.msra.mxu0 0.0
        %1787 = vmatprep.subr.mxu0 0.0
        %1788 = vmatpush1.msra.mxu0 0.0
        %1789 = vmatprep.subr.mxu0 0.0
        %1790 = vmatpush1.msra.mxu0 0.0
        %1791 = vmatprep.subr.mxu0 0.0
        %1792 = vmatpush1.msra.mxu0 0.0
        %1793 = vmatprep.subr.mxu0 0.0
        %1794 = vmatpush1.msra.mxu0 0.0
        %1795 = vmatprep.subr.mxu0 0.0
        %1796 = vmatpush1.msra.mxu0 0.0
        %1797 = vmatprep.subr.mxu0 0.0
        %1798 = vmatpush1.msra.mxu0 0.0
        %1799 = vmatprep.mubr.f32.mxu0 0.0
        %1800 = vmatmul.mubr.f32.gmra.mrb[0].mxu0 %v1733
        %v1801 = vpop.f32.mrb[0].mxu0
        %v1802 = vadd.f32 0.0, %v1801
        %v1803 = vpop.f32.mrb[0].mxu0
        %1804 = vdwg.mxu0
        %v1806 = vsel %vm599, %v1630, 0
        %1808 = vmatprep.subr.mxu0 0.0
        %1809 = vmatpush1.msra.mxu0 %v1653
        %1810 = vmatprep.subr.mxu0 0.0
        %1811 = vmatpush1.msra.mxu0 0.0
        %1812 = vmatprep.subr.mxu0 0.0
        %1813 = vmatpush1.msra.mxu0 0.0
        %1814 = vmatprep.subr.mxu0 0.0
        %1815 = vmatpush1.msra.mxu0 0.0
        %1816 = vmatprep.subr.mxu0 0.0
        %1817 = vmatpush1.msra.mxu0 0.0
        %1818 = vmatprep.subr.mxu0 0.0
        %1819 = vmatpush1.msra.mxu0 0.0
        %1820 = vmatprep.subr.mxu0 0.0
        %1821 = vmatpush1.msra.mxu0 0.0
        %1822 = vmatprep.subr.mxu0 0.0
        %1823 = vmatpush1.msra.mxu0 0.0
        %1824 = vmatprep.subr.mxu0 0.0
        %1825 = vmatpush1.msra.mxu0 0.0
        %1826 = vmatprep.subr.mxu0 0.0
        %1827 = vmatpush1.msra.mxu0 0.0
        %1828 = vmatprep.subr.mxu0 0.0
        %1829 = vmatpush1.msra.mxu0 0.0
        %1830 = vmatprep.subr.mxu0 0.0
        %1831 = vmatpush1.msra.mxu0 0.0
        %1832 = vmatprep.subr.mxu0 0.0
        %1833 = vmatpush1.msra.mxu0 0.0
        %1834 = vmatprep.subr.mxu0 0.0
        %1835 = vmatpush1.msra.mxu0 0.0
        %1836 = vmatprep.subr.mxu0 0.0
        %1837 = vmatpush1.msra.mxu0 0.0
        %1838 = vmatprep.subr.mxu0 0.0
        %1839 = vmatpush1.msra.mxu0 0.0
        %1840 = vmatprep.subr.mxu0 0.0
        %1841 = vmatpush1.msra.mxu0 0.0
        %1842 = vmatprep.subr.mxu0 0.0
        %1843 = vmatpush1.msra.mxu0 0.0
        %1844 = vmatprep.subr.mxu0 0.0
        %1845 = vmatpush1.msra.mxu0 0.0
        %1846 = vmatprep.subr.mxu0 0.0
        %1847 = vmatpush1.msra.mxu0 0.0
        %1848 = vmatprep.subr.mxu0 0.0
        %1849 = vmatpush1.msra.mxu0 0.0
        %1850 = vmatprep.subr.mxu0 0.0
        %1851 = vmatpush1.msra.mxu0 0.0
        %1852 = vmatprep.subr.mxu0 0.0
        %1853 = vmatpush1.msra.mxu0 0.0
        %1854 = vmatprep.subr.mxu0 0.0
        %1855 = vmatpush1.msra.mxu0 0.0
        %1856 = vmatprep.subr.mxu0 0.0
        %1857 = vmatpush1.msra.mxu0 0.0
        %1858 = vmatprep.subr.mxu0 0.0
        %1859 = vmatpush1.msra.mxu0 0.0
        %1860 = vmatprep.subr.mxu0 0.0
        %1861 = vmatpush1.msra.mxu0 0.0
        %1862 = vmatprep.subr.mxu0 0.0
        %1863 = vmatpush1.msra.mxu0 0.0
        %1864 = vmatprep.subr.mxu0 0.0
        %1865 = vmatpush1.msra.mxu0 0.0
        %1866 = vmatprep.subr.mxu0 0.0
        %1867 = vmatpush1.msra.mxu0 0.0
        %1868 = vmatprep.subr.mxu0 0.0
        %1869 = vmatpush1.msra.mxu0 0.0
        %1870 = vmatprep.subr.mxu0 0.0
        %1871 = vmatpush1.msra.mxu0 0.0
        %1872 = vmatprep.mubr.f32.mxu0 0.0
        %1873 = vmatmul.mubr.f32.gmra.mrb[0].mxu0 %v1806
        %v1874 = vpop.f32.mrb[0].mxu0
        %v1875 = vadd.f32 0.0, %v1874
        %v1876 = vpop.f32.mrb[0].mxu0
        %1877 = vdwg.mxu0
        %v1879 = vsel %vm599, %v1648, 0
        %1881 = vmatprep.subr.mxu0 0.0
        %1882 = vmatpush1.msra.mxu0 %v1654
        %1883 = vmatprep.subr.mxu0 0.0
        %1884 = vmatpush1.msra.mxu0 0.0
        %1885 = vmatprep.subr.mxu0 0.0
        %1886 = vmatpush1.msra.mxu0 0.0
        %1887 = vmatprep.subr.mxu0 0.0
        %1888 = vmatpush1.msra.mxu0 0.0
        %1889 = vmatprep.subr.mxu0 0.0
        %1890 = vmatpush1.msra.mxu0 0.0
        %1891 = vmatprep.subr.mxu0 0.0
        %1892 = vmatpush1.msra.mxu0 0.0
        %1893 = vmatprep.subr.mxu0 0.0
        %1894 = vmatpush1.msra.mxu0 0.0
        %1895 = vmatprep.subr.mxu0 0.0
        %1896 = vmatpush1.msra.mxu0 0.0
        %1897 = vmatprep.subr.mxu0 0.0
        %1898 = vmatpush1.msra.mxu0 0.0
        %1899 = vmatprep.subr.mxu0 0.0
        %1900 = vmatpush1.msra.mxu0 0.0
        %1901 = vmatprep.subr.mxu0 0.0
        %1902 = vmatpush1.msra.mxu0 0.0
        %1903 = vmatprep.subr.mxu0 0.0
        %1904 = vmatpush1.msra.mxu0 0.0
        %1905 = vmatprep.subr.mxu0 0.0
        %1906 = vmatpush1.msra.mxu0 0.0
        %1907 = vmatprep.subr.mxu0 0.0
        %1908 = vmatpush1.msra.mxu0 0.0
        %1909 = vmatprep.subr.mxu0 0.0
        %1910 = vmatpush1.msra.mxu0 0.0
        %1911 = vmatprep.subr.mxu0 0.0
        %1912 = vmatpush1.msra.mxu0 0.0
        %1913 = vmatprep.subr.mxu0 0.0
        %1914 = vmatpush1.msra.mxu0 0.0
        %1915 = vmatprep.subr.mxu0 0.0
        %1916 = vmatpush1.msra.mxu0 0.0
        %1917 = vmatprep.subr.mxu0 0.0
        %1918 = vmatpush1.msra.mxu0 0.0
        %1919 = vmatprep.subr.mxu0 0.0
        %1920 = vmatpush1.msra.mxu0 0.0
        %1921 = vmatprep.subr.mxu0 0.0
        %1922 = vmatpush1.msra.mxu0 0.0
        %1923 = vmatprep.subr.mxu0 0.0
        %1924 = vmatpush1.msra.mxu0 0.0
        %1925 = vmatprep.subr.mxu0 0.0
        %1926 = vmatpush1.msra.mxu0 0.0
        %1927 = vmatprep.subr.mxu0 0.0
        %1928 = vmatpush1.msra.mxu0 0.0
        %1929 = vmatprep.subr.mxu0 0.0
        %1930 = vmatpush1.msra.mxu0 0.0
        %1931 = vmatprep.subr.mxu0 0.0
        %1932 = vmatpush1.msra.mxu0 0.0
        %1933 = vmatprep.subr.mxu0 0.0
        %1934 = vmatpush1.msra.mxu0 0.0
        %1935 = vmatprep.subr.mxu0 0.0
        %1936 = vmatpush1.msra.mxu0 0.0
        %1937 = vmatprep.subr.mxu0 0.0
        %1938 = vmatpush1.msra.mxu0 0.0
        %1939 = vmatprep.subr.mxu0 0.0
        %1940 = vmatpush1.msra.mxu0 0.0
        %1941 = vmatprep.subr.mxu0 0.0
        %1942 = vmatpush1.msra.mxu0 0.0
        %1943 = vmatprep.subr.mxu0 0.0
        %1944 = vmatpush1.msra.mxu0 0.0
        %1945 = vmatprep.mubr.f32.mxu0 0.0
        %1946 = vmatmul.mubr.f32.gmra.mrb[0].mxu0 %v1879
        %v1947 = vpop.f32.mrb[0].mxu0
        %v1948 = vadd.f32 0.0, %v1947
        %v1949 = vpop.f32.mrb[0].mxu0
        %1950 = vdwg.mxu0
        %v1952 = vsel %vm599, %v1639, 0
        %1954 = vmatprep.subr.mxu0 0.0
        %1955 = vmatpush1.msra.mxu0 %v1655
        %1956 = vmatprep.subr.mxu0 0.0
        %1957 = vmatpush1.msra.mxu0 0.0
        %1958 = vmatprep.subr.mxu0 0.0
        %1959 = vmatpush1.msra.mxu0 0.0
        %1960 = vmatprep.subr.mxu0 0.0
        %1961 = vmatpush1.msra.mxu0 0.0
        %1962 = vmatprep.subr.mxu0 0.0
        %1963 = vmatpush1.msra.mxu0 0.0
        %1964 = vmatprep.subr.mxu0 0.0
        %1965 = vmatpush1.msra.mxu0 0.0
        %1966 = vmatprep.subr.mxu0 0.0
        %1967 = vmatpush1.msra.mxu0 0.0
        %1968 = vmatprep.subr.mxu0 0.0
        %1969 = vmatpush1.msra.mxu0 0.0
        %1970 = vmatprep.subr.mxu0 0.0
        %1971 = vmatpush1.msra.mxu0 0.0
        %1972 = vmatprep.subr.mxu0 0.0
        %1973 = vmatpush1.msra.mxu0 0.0
        %1974 = vmatprep.subr.mxu0 0.0
        %1975 = vmatpush1.msra.mxu0 0.0
        %1976 = vmatprep.subr.mxu0 0.0
        %1977 = vmatpush1.msra.mxu0 0.0
        %1978 = vmatprep.subr.mxu0 0.0
        %1979 = vmatpush1.msra.mxu0 0.0
        %1980 = vmatprep.subr.mxu0 0.0
        %1981 = vmatpush1.msra.mxu0 0.0
        %1982 = vmatprep.subr.mxu0 0.0
        %1983 = vmatpush1.msra.mxu0 0.0
        %1984 = vmatprep.subr.mxu0 0.0
        %1985 = vmatpush1.msra.mxu0 0.0
        %1986 = vmatprep.subr.mxu0 0.0
        %1987 = vmatpush1.msra.mxu0 0.0
        %1988 = vmatprep.subr.mxu0 0.0
        %1989 = vmatpush1.msra.mxu0 0.0
        %1990 = vmatprep.subr.mxu0 0.0
        %1991 = vmatpush1.msra.mxu0 0.0
        %1992 = vmatprep.subr.mxu0 0.0
        %1993 = vmatpush1.msra.mxu0 0.0
        %1994 = vmatprep.subr.mxu0 0.0
        %1995 = vmatpush1.msra.mxu0 0.0
        %1996 = vmatprep.subr.mxu0 0.0
        %1997 = vmatpush1.msra.mxu0 0.0
        %1998 = vmatprep.subr.mxu0 0.0
        %1999 = vmatpush1.msra.mxu0 0.0
        %2000 = vmatprep.subr.mxu0 0.0
        %2001 = vmatpush1.msra.mxu0 0.0
        %2002 = vmatprep.subr.mxu0 0.0
        %2003 = vmatpush1.msra.mxu0 0.0
        %2004 = vmatprep.subr.mxu0 0.0
        %2005 = vmatpush1.msra.mxu0 0.0
        %2006 = vmatprep.subr.mxu0 0.0
        %2007 = vmatpush1.msra.mxu0 0.0
        %2008 = vmatprep.subr.mxu0 0.0
        %2009 = vmatpush1.msra.mxu0 0.0
        %2010 = vmatprep.subr.mxu0 0.0
        %2011 = vmatpush1.msra.mxu0 0.0
        %2012 = vmatprep.subr.mxu0 0.0
        %2013 = vmatpush1.msra.mxu0 0.0
        %2014 = vmatprep.subr.mxu0 0.0
        %2015 = vmatpush1.msra.mxu0 0.0
        %2016 = vmatprep.subr.mxu0 0.0
        %2017 = vmatpush1.msra.mxu0 0.0
        %2018 = vmatprep.mubr.f32.mxu0 0.0
        %2019 = vmatmul.mubr.f32.gmra.mrb[0].mxu0 %v1952
        %v2020 = vpop.f32.mrb[0].mxu0
        %v2021 = vadd.f32 0.0, %v2020
        %v2022 = vpop.f32.mrb[0].mxu0
        %2023 = vdwg.mxu0
        %v2025 = vsel %vm599, %v1649, 0
        %2027 = vmatprep.subr.mxu0 0.0
        %2028 = vmatpush1.msra.mxu0 %v1656
        %2029 = vmatprep.subr.mxu0 0.0
        %2030 = vmatpush1.msra.mxu0 0.0
        %2031 = vmatprep.subr.mxu0 0.0
        %2032 = vmatpush1.msra.mxu0 0.0
        %2033 = vmatprep.subr.mxu0 0.0
        %2034 = vmatpush1.msra.mxu0 0.0
        %2035 = vmatprep.subr.mxu0 0.0
        %2036 = vmatpush1.msra.mxu0 0.0
        %2037 = vmatprep.subr.mxu0 0.0
        %2038 = vmatpush1.msra.mxu0 0.0
        %2039 = vmatprep.subr.mxu0 0.0
        %2040 = vmatpush1.msra.mxu0 0.0
        %2041 = vmatprep.subr.mxu0 0.0
        %2042 = vmatpush1.msra.mxu0 0.0
        %2043 = vmatprep.subr.mxu0 0.0
        %2044 = vmatpush1.msra.mxu0 0.0
        %2045 = vmatprep.subr.mxu0 0.0
        %2046 = vmatpush1.msra.mxu0 0.0
        %2047 = vmatprep.subr.mxu0 0.0
        %2048 = vmatpush1.msra.mxu0 0.0
        %2049 = vmatprep.subr.mxu0 0.0
        %2050 = vmatpush1.msra.mxu0 0.0
        %2051 = vmatprep.subr.mxu0 0.0
        %2052 = vmatpush1.msra.mxu0 0.0
        %2053 = vmatprep.subr.mxu0 0.0
        %2054 = vmatpush1.msra.mxu0 0.0
        %2055 = vmatprep.subr.mxu0 0.0
        %2056 = vmatpush1.msra.mxu0 0.0
        %2057 = vmatprep.subr.mxu0 0.0
        %2058 = vmatpush1.msra.mxu0 0.0
        %2059 = vmatprep.subr.mxu0 0.0
        %2060 = vmatpush1.msra.mxu0 0.0
        %2061 = vmatprep.subr.mxu0 0.0
        %2062 = vmatpush1.msra.mxu0 0.0
        %2063 = vmatprep.subr.mxu0 0.0
        %2064 = vmatpush1.msra.mxu0 0.0
        %2065 = vmatprep.subr.mxu0 0.0
        %2066 = vmatpush1.msra.mxu0 0.0
        %2067 = vmatprep.subr.mxu0 0.0
        %2068 = vmatpush1.msra.mxu0 0.0
        %2069 = vmatprep.subr.mxu0 0.0
        %2070 = vmatpush1.msra.mxu0 0.0
        %2071 = vmatprep.subr.mxu0 0.0
        %2072 = vmatpush1.msra.mxu0 0.0
        %2073 = vmatprep.subr.mxu0 0.0
        %2074 = vmatpush1.msra.mxu0 0.0
        %2075 = vmatprep.subr.mxu0 0.0
        %2076 = vmatpush1.msra.mxu0 0.0
        %2077 = vmatprep.subr.mxu0 0.0
        %2078 = vmatpush1.msra.mxu0 0.0
        %2079 = vmatprep.subr.mxu0 0.0
        %2080 = vmatpush1.msra.mxu0 0.0
        %2081 = vmatprep.subr.mxu0 0.0
        %2082 = vmatpush1.msra.mxu0 0.0
        %2083 = vmatprep.subr.mxu0 0.0
        %2084 = vmatpush1.msra.mxu0 0.0
        %2085 = vmatprep.subr.mxu0 0.0
        %2086 = vmatpush1.msra.mxu0 0.0
        %2087 = vmatprep.subr.mxu0 0.0
        %2088 = vmatpush1.msra.mxu0 0.0
        %2089 = vmatprep.subr.mxu0 0.0
        %2090 = vmatpush1.msra.mxu0 0.0
        %2091 = vmatprep.mubr.f32.mxu0 0.0
        %2092 = vmatmul.mubr.f32.gmra.mrb[0].mxu0 %v2025
        %v2093 = vpop.f32.mrb[0].mxu0
        %v2094 = vadd.f32 0.0, %v2093
        %v2095 = vpop.f32.mrb[0].mxu0
        %2096 = vdwg.mxu0
        %v2098 = vsel %vm599, %v1646, 0
        %2100 = vmatprep.subr.mxu0 0.0
        %2101 = vmatpush1.msra.mxu0 %v1657
        %2102 = vmatprep.subr.mxu0 0.0
        %2103 = vmatpush1.msra.mxu0 0.0
        %2104 = vmatprep.subr.mxu0 0.0
        %2105 = vmatpush1.msra.mxu0 0.0
        %2106 = vmatprep.subr.mxu0 0.0
        %2107 = vmatpush1.msra.mxu0 0.0
        %2108 = vmatprep.subr.mxu0 0.0
        %2109 = vmatpush1.msra.mxu0 0.0
        %2110 = vmatprep.subr.mxu0 0.0
        %2111 = vmatpush1.msra.mxu0 0.0
        %2112 = vmatprep.subr.mxu0 0.0
        %2113 = vmatpush1.msra.mxu0 0.0
        %2114 = vmatprep.subr.mxu0 0.0
        %2115 = vmatpush1.msra.mxu0 0.0
        %2116 = vmatprep.subr.mxu0 0.0
        %2117 = vmatpush1.msra.mxu0 0.0
        %2118 = vmatprep.subr.mxu0 0.0
        %2119 = vmatpush1.msra.mxu0 0.0
        %2120 = vmatprep.subr.mxu0 0.0
        %2121 = vmatpush1.msra.mxu0 0.0
        %2122 = vmatprep.subr.mxu0 0.0
        %2123 = vmatpush1.msra.mxu0 0.0
        %2124 = vmatprep.subr.mxu0 0.0
        %2125 = vmatpush1.msra.mxu0 0.0
        %2126 = vmatprep.subr.mxu0 0.0
        %2127 = vmatpush1.msra.mxu0 0.0
        %2128 = vmatprep.subr.mxu0 0.0
        %2129 = vmatpush1.msra.mxu0 0.0
        %2130 = vmatprep.subr.mxu0 0.0
        %2131 = vmatpush1.msra.mxu0 0.0
        %2132 = vmatprep.subr.mxu0 0.0
        %2133 = vmatpush1.msra.mxu0 0.0
        %2134 = vmatprep.subr.mxu0 0.0
        %2135 = vmatpush1.msra.mxu0 0.0
        %2136 = vmatprep.subr.mxu0 0.0
        %2137 = vmatpush1.msra.mxu0 0.0
        %2138 = vmatprep.subr.mxu0 0.0
        %2139 = vmatpush1.msra.mxu0 0.0
        %2140 = vmatprep.subr.mxu0 0.0
        %2141 = vmatpush1.msra.mxu0 0.0
        %2142 = vmatprep.subr.mxu0 0.0
        %2143 = vmatpush1.msra.mxu0 0.0
        %2144 = vmatprep.subr.mxu0 0.0
        %2145 = vmatpush1.msra.mxu0 0.0
        %2146 = vmatprep.subr.mxu0 0.0
        %2147 = vmatpush1.msra.mxu0 0.0
        %2148 = vmatprep.subr.mxu0 0.0
        %2149 = vmatpush1.msra.mxu0 0.0
        %2150 = vmatprep.subr.mxu0 0.0
        %2151 = vmatpush1.msra.mxu0 0.0
        %2152 = vmatprep.subr.mxu0 0.0
        %2153 = vmatpush1.msra.mxu0 0.0
        %2154 = vmatprep.subr.mxu0 0.0
        %2155 = vmatpush1.msra.mxu0 0.0
        %2156 = vmatprep.subr.mxu0 0.0
        %2157 = vmatpush1.msra.mxu0 0.0
        %2158 = vmatprep.subr.mxu0 0.0
        %2159 = vmatpush1.msra.mxu0 0.0
        %2160 = vmatprep.subr.mxu0 0.0
        %2161 = vmatpush1.msra.mxu0 0.0
        %2162 = vmatprep.subr.mxu0 0.0
        %2163 = vmatpush1.msra.mxu0 0.0
        %2164 = vmatprep.mubr.f32.mxu0 0.0
        %2165 = vmatmul.mubr.f32.gmra.mrb[0].mxu0 %v2098
        %v2166 = vpop.f32.mrb[0].mxu0
        %v2167 = vadd.f32 0.0, %v2166
        %v2168 = vpop.f32.mrb[0].mxu0
        %2169 = vdwg.mxu0
        %v2171 = vsel %vm599, %v1650, 0
        %2173 = vmatprep.subr.mxu0 0.0
        %2174 = vmatpush1.msra.mxu0 %v1658
        %2175 = vmatprep.subr.mxu0 0.0
        %2176 = vmatpush1.msra.mxu0 0.0
        %2177 = vmatprep.subr.mxu0 0.0
        %2178 = vmatpush1.msra.mxu0 0.0
        %2179 = vmatprep.subr.mxu0 0.0
        %2180 = vmatpush1.msra.mxu0 0.0
        %2181 = vmatprep.subr.mxu0 0.0
        %2182 = vmatpush1.msra.mxu0 0.0
        %2183 = vmatprep.subr.mxu0 0.0
        %2184 = vmatpush1.msra.mxu0 0.0
        %2185 = vmatprep.subr.mxu0 0.0
        %2186 = vmatpush1.msra.mxu0 0.0
        %2187 = vmatprep.subr.mxu0 0.0
        %2188 = vmatpush1.msra.mxu0 0.0
        %2189 = vmatprep.subr.mxu0 0.0
        %2190 = vmatpush1.msra.mxu0 0.0
        %2191 = vmatprep.subr.mxu0 0.0
        %2192 = vmatpush1.msra.mxu0 0.0
        %2193 = vmatprep.subr.mxu0 0.0
        %2194 = vmatpush1.msra.mxu0 0.0
        %2195 = vmatprep.subr.mxu0 0.0
        %2196 = vmatpush1.msra.mxu0 0.0
        %2197 = vmatprep.subr.mxu0 0.0
        %2198 = vmatpush1.msra.mxu0 0.0
        %2199 = vmatprep.subr.mxu0 0.0
        %2200 = vmatpush1.msra.mxu0 0.0
        %2201 = vmatprep.subr.mxu0 0.0
        %2202 = vmatpush1.msra.mxu0 0.0
        %2203 = vmatprep.subr.mxu0 0.0
        %2204 = vmatpush1.msra.mxu0 0.0
        %2205 = vmatprep.subr.mxu0 0.0
        %2206 = vmatpush1.msra.mxu0 0.0
        %2207 = vmatprep.subr.mxu0 0.0
        %2208 = vmatpush1.msra.mxu0 0.0
        %2209 = vmatprep.subr.mxu0 0.0
        %2210 = vmatpush1.msra.mxu0 0.0
        %2211 = vmatprep.subr.mxu0 0.0
        %2212 = vmatpush1.msra.mxu0 0.0
        %2213 = vmatprep.subr.mxu0 0.0
        %2214 = vmatpush1.msra.mxu0 0.0
        %2215 = vmatprep.subr.mxu0 0.0
        %2216 = vmatpush1.msra.mxu0 0.0
        %2217 = vmatprep.subr.mxu0 0.0
        %2218 = vmatpush1.msra.mxu0 0.0
        %2219 = vmatprep.subr.mxu0 0.0
        %2220 = vmatpush1.msra.mxu0 0.0
        %2221 = vmatprep.subr.mxu0 0.0
        %2222 = vmatpush1.msra.mxu0 0.0
        %2223 = vmatprep.subr.mxu0 0.0
        %2224 = vmatpush1.msra.mxu0 0.0
        %2225 = vmatprep.subr.mxu0 0.0
        %2226 = vmatpush1.msra.mxu0 0.0
        %2227 = vmatprep.subr.mxu0 0.0
        %2228 = vmatpush1.msra.mxu0 0.0
        %2229 = vmatprep.subr.mxu0 0.0
        %2230 = vmatpush1.msra.mxu0 0.0
        %2231 = vmatprep.subr.mxu0 0.0
        %2232 = vmatpush1.msra.mxu0 0.0
        %2233 = vmatprep.subr.mxu0 0.0
        %2234 = vmatpush1.msra.mxu0 0.0
        %2235 = vmatprep.subr.mxu0 0.0
        %2236 = vmatpush1.msra.mxu0 0.0
        %2237 = vmatprep.mubr.f32.mxu0 0.0
        %2238 = vmatmul.mubr.f32.gmra.mrb[0].mxu0 %v2171
        %v2239 = vpop.f32.mrb[0].mxu0
        %v2240 = vadd.f32 0.0, %v2239
        %v2241 = vpop.f32.mrb[0].mxu0
        %2242 = vdwg.mxu0
        %v2243 = vcombine.low %v1729, %v1875
        %v2245 = vunpack.c.l.s4 1983009808
        %v2246 = vunpack.c.0.s8 %v2245
        %v2247 = vlaneseq
        %v2248 = vshrl.u32 %v2247, 7
        %v2249 = vsub.s32 %v2246, %v2248
        %v2250 = vrot.slane %v2243, %v2249
        %v2251 = vcombine.low %v1802, %v1948
        %v2253 = vunpack.c.l.s4 1983009808
        %v2254 = vunpack.c.0.s8 %v2253
        %v2255 = vlaneseq
        %v2256 = vshrl.u32 %v2255, 7
        %v2257 = vsub.s32 %v2254, %v2256
        %v2258 = vrot.slane %v2251, %v2257
        %v2259 = vcombine.low %v2021, %v2167
        %v2261 = vunpack.c.l.s4 1983009808
        %v2262 = vunpack.c.0.s8 %v2261
        %v2263 = vlaneseq
        %v2264 = vshrl.u32 %v2263, 7
        %v2265 = vsub.s32 %v2262, %v2264
        %v2266 = vrot.slane %v2259, %v2265
        %v2267 = vcombine.low %v2094, %v2240
        %v2269 = vunpack.c.l.s4 1983009808
        %v2270 = vunpack.c.0.s8 %v2269
        %v2271 = vlaneseq
        %v2272 = vshrl.u32 %v2271, 7
        %v2273 = vsub.s32 %v2270, %v2272
        %v2274 = vrot.slane %v2267, %v2273
        %v2275 = vcombine.low %v2250, %v2258
        %v2276 = vcombine.high %v2250, %v2258
        %v2278 = vunpack.c.l.s4 1934713408
        %v2279 = vunpack.c.0.s8 %v2278
        %v2280 = vlaneseq
        %v2281 = vshrl.u32 %v2280, 7
        %v2282 = vsub.s32 %v2279, %v2281
        %v2283 = vrot.slane %v2275, %v2282
        %v2285 = vunpack.c.l.s4 1934713408
        %v2286 = vunpack.c.0.s8 %v2285
        %v2287 = vlaneseq
        %v2288 = vshrl.u32 %v2287, 7
        %v2289 = vsub.s32 %v2286, %v2288
        %v2290 = vrot.slane %v2276, %v2289
        %v2291 = vcombine.low %v2266, %v2274
        %v2292 = vcombine.high %v2266, %v2274
        %v2294 = vunpack.c.l.s4 1934713408
        %v2295 = vunpack.c.0.s8 %v2294
        %v2296 = vlaneseq
        %v2297 = vshrl.u32 %v2296, 7
        %v2298 = vsub.s32 %v2295, %v2297
        %v2299 = vrot.slane %v2291, %v2298
        %v2301 = vunpack.c.l.s4 1934713408
        %v2302 = vunpack.c.0.s8 %v2301
        %v2303 = vlaneseq
        %v2304 = vshrl.u32 %v2303, 7
        %v2305 = vsub.s32 %v2302, %v2304
        %v2306 = vrot.slane %v2292, %v2305
        %v2307 = vcombine.low %v2283, %v2299
        %v2308 = vcombine.high %v2283, %v2299
        %v2309 = vcombine.low %v2290, %v2306
        %v2310 = vcombine.high %v2290, %v2306
        %vm2311 = vcmask 31744
        %2312 = vst.msk [vmem:[%s450] sm:$0xff] %vm2311, %v2307
        %2313 = vst.msk [vmem:[%s450 + $0x8] sm:$0xff] %vm2311, %v2308
        %2314 = vst.msk [vmem:[%s450 + $0x10] sm:$0xff] %vm2311, %v2309
        %2315 = vst.msk [vmem:[%s450 + $0x18] sm:$0xff] %vm2311, %v2310
        %s2316 = sand.u32 %s260, 1
        %s2317 = scalar_lea.sflag [#allocation4], %s2316
        %s2318 = sand.u32 %s260, 1
        %s2319 = smul.addr %s2318, 32
        %s2320 = scalar_lea.vmem [#allocation3], %s2319
        // Predicated region
        $region53: #{tpu_custom_call.1} parent=51 // pred_check
          %p2321 = pneg %p270
        $region54: #{tpu_custom_call.1} parent=51 // pred_check_branch
          %2323 = sbr.rel (%p2321) target = $region56
        $region55: #{tpu_custom_call.1} parent=51 // pred_region
          %s2325 = ssub.s32 512, 512
          %2326 = vsyncadd %s2317, %s2325
          %s2327 = smul.addr %s26, 4
          %s2328 = sadd.s32 %s27, %s2327
          %s2329 = smul.addr %s2328, 128
          %s2330 = scalar_lea.hbm %s8, %s2329
          %s2331 = sshll.u32 %s2320, 4
          %s2332 = int_to_ptr.vmem [resolvable:$true] %s2331
          %2337 = dma.vmem_to_hbm [thread:$0]  %s2332, 512, %s2330, %s2317, 128, 128, 8
        $region56: #{tpu_custom_call.1} parent=51 // pred_fallthru
          _
      $region52: #{tpu_custom_call.1} parent=5 // pred_fallthru
        _
      %p2338 = scmp.le.s32.totalorder 2, %s17
      // Predicated region
      $region57: #{tpu_custom_call.1} parent=5 // pred_check
        %p2339 = pneg %p2338
      $region58: #{tpu_custom_call.1} parent=5 // pred_check_branch
        %2341 = sbr.rel (%p2339) target = $region60
      $region59: #{tpu_custom_call.1} parent=5 // pred_region
        %s2342 = ssub.s32 %s17, 2
        // Predicated region
        $region61: #{tpu_custom_call.1} parent=59 // pred_check
          %p2343 = pneg %p276
        $region62: #{tpu_custom_call.1} parent=59 // pred_check_branch
          %2345 = sbr.rel (%p2343) target = $region64
        $region63: #{tpu_custom_call.1} parent=59 // pred_region
          %s2346 = sand.u32 %s261, 1
          %s2347 = scalar_lea.sflag [#allocation4], %s2346
          %s2348 = sand.u32 %s261, 1
          %s2349 = smul.addr %s2348, 32
          %s2350 = scalar_lea.vmem [#allocation3], %s2349
          %2351 = dma.done %s2347, 512
        $region64: #{tpu_custom_call.1} parent=59 // pred_fallthru
          _
      $region60: #{tpu_custom_call.1} parent=5 // pred_fallthru
        _
    $region6: #{tpu_custom_call.1} parent=1 // loop_footer
      %s21 = sadd.s32 1, %s17
    $region7: #{tpu_custom_call.1} parent=1 // loop_footer_branch
      %16 = sbr.rel target = $region3
    $region8: #{tpu_custom_call.1} parent=1 // loop_exit
      _
    %2352 = vsyncpa [#allocation4], 1
    %s2353 = scalar_lea.sflag [#allocation4], 1
    %2354 = vsyncpa %s2353, 1

</llo_original>
